<compile_context>
chip_gen: v5e
topology: v5e:2x2
jax: 0.10.0
libtpu: 0.0.40
codegen_flags: <defaults>
</compile_context>

<pallas_src>
import math
import functools

import jax
import jax.numpy as jnp
from jax.experimental import pallas as pl
from jax.experimental.pallas import tpu as pltpu


_NEG_BIG = -1e30  # finite "masked" score: avoids inf-inf NaNs in online softmax


# ----------------------------- in-kernel helpers -----------------------------
def _layernorm(x, w, eps=1e-5):
    # nn.LayerNorm(C, bias=False): f32 stats over the last dim, scale by w (1, C).
    mu = jnp.mean(x, axis=-1, keepdims=True)
    xc = x - mu
    var = jnp.mean(xc * xc, axis=-1, keepdims=True)
    return xc * jax.lax.rsqrt(var + eps) * w


def _gelu_tanh(x):
    # nn.GELU(approximate='tanh'), computed in f32 (tanh runs on the EUP).
    c = math.sqrt(2.0 / math.pi)
    return 0.5 * x * (1.0 + jnp.tanh(c * (x + 0.044715 * x * x * x)))


# ------------------------- kernel A: LN1 + QKV projection --------------------
def qkv_kernel(x_ref, w_ln1_ref, w_attn_ref, qkv_ref):
    h1 = _layernorm(x_ref[0], w_ln1_ref[...]).astype(jnp.bfloat16)
    qkv_ref[0] = jnp.dot(h1, w_attn_ref[...],
                         preferred_element_type=jnp.float32).astype(qkv_ref.dtype)


# ----------------- kernel B: causal flash attention (per batch, head) --------
def flash_kernel(q_ref, k_ref, v_ref, o_ref, m_scr, l_scr, acc_scr, *,
                 scale, tq, tkv):
    qi = pl.program_id(2)
    ki = pl.program_id(3)

    @pl.when(ki == 0)
    def _():
        m_scr[...] = jnp.full_like(m_scr, _NEG_BIG)
        l_scr[...] = jnp.zeros_like(l_scr)
        acc_scr[...] = jnp.zeros_like(acc_scr)

    q_start = qi * tq
    k_start = ki * tkv

    # Skip KV blocks that are entirely above the causal diagonal for this Q tile.
    @pl.when(q_start + (tq - 1) >= k_start)
    def _():
        # q @ k^T without materializing a transpose (contract the last dims).
        s = jax.lax.dot_general(
            q_ref[0, 0], k_ref[0, 0], (((1,), (1,)), ((), ())),
            preferred_element_type=jnp.float32) * scale              # (tq, tkv) f32
        rows = q_start + jax.lax.broadcasted_iota(jnp.int32, (tq, tkv), 0)
        cols = k_start + jax.lax.broadcasted_iota(jnp.int32, (tq, tkv), 1)
        s = jnp.where(cols <= rows, s, _NEG_BIG)

        m_prev = m_scr[...]
        m_new = jnp.maximum(m_prev, jnp.max(s, axis=-1, keepdims=True))
        alpha = jnp.exp(m_prev - m_new)
        p = jnp.exp(s - m_new)
        l_scr[...] = alpha * l_scr[...] + jnp.sum(p, axis=-1, keepdims=True)
        acc_scr[...] = alpha * acc_scr[...] + jnp.dot(
            p.astype(jnp.bfloat16), v_ref[0, 0],
            preferred_element_type=jnp.float32)
        m_scr[...] = m_new

    @pl.when(ki == pl.num_programs(3) - 1)
    def _():
        o_ref[0, 0] = (acc_scr[...] *
                       pl.reciprocal(l_scr[...], approx=True)).astype(o_ref.dtype)


# ------ kernel C: attn proj + residual, LN2, hidden-tiled MLP + residual -----
def proj_mlp_kernel(x_ref, y_ref, w_aproj_ref, w_ln2_ref, w_fc_ref, w_mproj_ref,
                    out_ref, x1_scr, h2_scr, acc_scr):
    hid = pl.program_id(2)

    @pl.when(hid == 0)
    def _():
        attn = jnp.dot(y_ref[0], w_aproj_ref[...],
                       preferred_element_type=jnp.float32)
        x1 = x_ref[0] + attn                                  # first residual (f32)
        x1_scr[...] = x1
        h2_scr[...] = _layernorm(x1, w_ln2_ref[...]).astype(jnp.bfloat16)
        acc_scr[...] = jnp.zeros_like(acc_scr)

    hmid = jnp.dot(h2_scr[...], w_fc_ref[...],
                   preferred_element_type=jnp.float32)        # (tt, hid_tile) f32
    hmid = _gelu_tanh(hmid).astype(jnp.bfloat16)
    acc_scr[...] += jnp.dot(hmid, w_mproj_ref[...],
                            preferred_element_type=jnp.float32)

    @pl.when(hid == pl.num_programs(2) - 1)
    def _():
        out_ref[0] = (x1_scr[...] + acc_scr[...]).astype(out_ref.dtype)


# --------------------------------- wrapper ------------------------------------
def _vmem_capacity_bytes():
    # Trace-time capability query; fall back to the smallest per-core VMEM (v7x).
    try:
        return int(pltpu.get_tpu_info().vmem_capacity_bytes)
    except Exception:
        return 64 * 2**20


def _pick_tile(dim, prefs):
    for t in prefs:
        if dim % t == 0:
            return t
    return dim  # full extent (always a legal BlockSpec block dim)


@functools.partial(jax.jit, static_argnames=("n_head",))
def transformer_block(x, params, n_head):
    B, T, C = x.shape
    hd = C // n_head

    vmem_cap = _vmem_capacity_bytes()
    small_vmem = vmem_cap < 96 * 2**20                 # v7x-class budget
    vmem_limit = int(0.75 * vmem_cap)                  # leave compiler headroom

    # VMEM-aware sequence / hidden tiles (128-multiples; fall back to full dim).
    tq = _pick_tile(T, (128, 256) if small_vmem else (256, 128))
    tkv = tq
    tt = _pick_tile(T, (128, 256) if small_vmem else (512, 256, 128))
    hid_tile = _pick_tile(4 * C, (256, 512) if small_vmem
                          else (1024, 512, 256, 128))

    # PyTorch Linear computes x @ W^T: pre-transpose and pre-cast to bf16 so
    # every in-kernel matmul is a native bf16 MXU op with f32 accumulation.
    # (Inside jit, so this is compiled once with the block; no eager dispatch.)
    w_ln1 = params["w_ln1"].reshape(1, C).astype(jnp.float32)
    w_ln2 = params["w_ln2"].reshape(1, C).astype(jnp.float32)
    w_attn_t = params["w_attn"].T.astype(jnp.bfloat16)      # (C, 3C)
    w_aproj_t = params["w_aproj"].T.astype(jnp.bfloat16)    # (C, C)
    w_fc_t = params["w_fc"].T.astype(jnp.bfloat16)          # (C, 4C)
    w_mproj_t = params["w_mproj"].T.astype(jnp.bfloat16)    # (4C, C)

    # TODO(synk): single-buffer the grid-invariant weight specs with
    # pipeline_mode=pl.Buffered(1) once verified on the target jax build.

    # --- kernel A: qkv = LN1(x) @ W_attn^T, lane-dense (B, T, 3C) bf16 --------
    qkv = pl.pallas_call(
        qkv_kernel,
        out_shape=jax.ShapeDtypeStruct((B, T, 3 * C), jnp.bfloat16),
        grid_spec=pltpu.PrefetchScalarGridSpec(
            num_scalar_prefetch=0,
            grid=(B, T // tt),
            in_specs=[
                pl.BlockSpec((1, tt, C), lambda b, t: (b, t, 0)),
                pl.BlockSpec((1, C), lambda b, t: (0, 0)),
                pl.BlockSpec((C, 3 * C), lambda b, t: (0, 0)),
            ],
            out_specs=pl.BlockSpec((1, tt, 3 * C), lambda b, t: (b, t, 0)),
        ),
        compiler_params=pltpu.CompilerParams(
            dimension_semantics=("parallel", "parallel"),
            vmem_limit_bytes=vmem_limit),
    )(x, w_ln1, w_attn_t)

    # Head-major split (B, H, T, hd) done by XLA (mem-bound relayout, bf16).
    qkv = qkv.reshape(B, T, 3, n_head, hd)
    q = jnp.transpose(qkv[:, :, 0], (0, 2, 1, 3))
    k = jnp.transpose(qkv[:, :, 1], (0, 2, 1, 3))
    v = jnp.transpose(qkv[:, :, 2], (0, 2, 1, 3))

    # --- kernel B: causal flash attention over (B, H, Q-tiles, KV-tiles) ------
    flash = functools.partial(flash_kernel, scale=1.0 / math.sqrt(hd),
                              tq=tq, tkv=tkv)
    y = pl.pallas_call(
        flash,
        out_shape=jax.ShapeDtypeStruct((B, n_head, T, hd), jnp.bfloat16),
        grid_spec=pltpu.PrefetchScalarGridSpec(
            num_scalar_prefetch=0,
            grid=(B, n_head, T // tq, T // tkv),
            in_specs=[
                pl.BlockSpec((1, 1, tq, hd), lambda b, h, i, j: (b, h, i, 0)),
                pl.BlockSpec((1, 1, tkv, hd), lambda b, h, i, j: (b, h, j, 0)),
                pl.BlockSpec((1, 1, tkv, hd), lambda b, h, i, j: (b, h, j, 0)),
            ],
            out_specs=pl.BlockSpec((1, 1, tq, hd), lambda b, h, i, j: (b, h, i, 0)),
            scratch_shapes=[
                pltpu.VMEM((tq, 1), jnp.float32),      # running max m
                pltpu.VMEM((tq, 1), jnp.float32),      # running denom l
                pltpu.VMEM((tq, hd), jnp.float32),     # context accumulator
            ],
        ),
        compiler_params=pltpu.CompilerParams(
            dimension_semantics=("parallel", "parallel", "parallel", "arbitrary"),
            vmem_limit_bytes=vmem_limit),
    )(q, k, v)

    # Back to (B, T, C) for the output projection (XLA relayout, bf16).
    y2d = jnp.transpose(y, (0, 2, 1, 3)).reshape(B, T, C)

    # --- kernel C: attn proj + residual, LN2, hidden-tiled MLP + residual -----
    out = pl.pallas_call(
        proj_mlp_kernel,
        out_shape=jax.ShapeDtypeStruct((B, T, C), x.dtype),
        grid_spec=pltpu.PrefetchScalarGridSpec(
            num_scalar_prefetch=0,
            grid=(B, T // tt, (4 * C) // hid_tile),
            in_specs=[
                pl.BlockSpec((1, tt, C), lambda b, t, h: (b, t, 0)),      # x
                pl.BlockSpec((1, tt, C), lambda b, t, h: (b, t, 0)),      # attn ctx
                pl.BlockSpec((C, C), lambda b, t, h: (0, 0)),             # W_aproj^T
                pl.BlockSpec((1, C), lambda b, t, h: (0, 0)),             # ln_2 w
                pl.BlockSpec((C, hid_tile), lambda b, t, h: (0, h)),      # W_fc^T slice
                pl.BlockSpec((hid_tile, C), lambda b, t, h: (h, 0)),      # W_mproj^T slice
            ],
            out_specs=pl.BlockSpec((1, tt, C), lambda b, t, h: (b, t, 0)),
            scratch_shapes=[
                pltpu.VMEM((tt, C), jnp.float32),      # x1 (first residual)
                pltpu.VMEM((tt, C), jnp.bfloat16),     # LN2(x1) in bf16
                pltpu.VMEM((tt, C), jnp.float32),      # MLP accumulator
            ],
        ),
        compiler_params=pltpu.CompilerParams(
            dimension_semantics=("parallel", "parallel", "arbitrary"),
            vmem_limit_bytes=vmem_limit),
    )(x, y2d, w_aproj_t, w_ln2, w_fc_t, w_mproj_t)

    return out


# ---------------------------- pure-JAX reference ------------------------------
def block_ref(x, params, n_head):
    B, T, C = x.shape
    hd = C // n_head

    def ln(z, w):
        mu = z.mean(-1, keepdims=True)
        var = ((z - mu) ** 2).mean(-1, keepdims=True)
        return (z - mu) / jnp.sqrt(var + 1e-5) * w

    h1 = ln(x, params["w_ln1"])
    qkv = h1 @ params["w_attn"].T
    q, k, v = jnp.split(qkv, 3, axis=-1)
    q = q.reshape(B, T, n_head, hd).transpose(0, 2, 1, 3)
    k = k.reshape(B, T, n_head, hd).transpose(0, 2, 1, 3)
    v = v.reshape(B, T, n_head, hd).transpose(0, 2, 1, 3)
    att = jnp.einsum("bhtd,bhsd->bhts", q, k) / math.sqrt(hd)
    mask = jnp.tril(jnp.ones((T, T), bool))
    att = jnp.where(mask, att, -jnp.inf)
    att = jax.nn.softmax(att, axis=-1)
    y = jnp.einsum("bhts,bhsd->bhtd", att, v).transpose(0, 2, 1, 3).reshape(B, T, C)
    x1 = x + y @ params["w_aproj"].T
    h2 = ln(x1, params["w_ln2"])
    hmid = jax.nn.gelu(h2 @ params["w_fc"].T, approximate=True)
    return x1 + hmid @ params["w_mproj"].T


# ----------------------------------- main --------------------------------------
if __name__ == "__main__":
    B, T, C, n_head = 2, 8, 32, 4   # block_size == T

    key = jax.random.PRNGKey(0)
    kx, k1, k2, k3, k4 = jax.random.split(key, 5)
    x = jax.random.normal(kx, (B, T, C), dtype=jnp.float32)

    params = {
        "w_ln1": jnp.ones((C,), jnp.float32),
        "w_attn": 0.02 * jax.random.normal(k1, (3 * C, C), jnp.float32),
        "w_aproj": 0.02 * jax.random.normal(k2, (C, C), jnp.float32),
        "w_ln2": jnp.ones((C,), jnp.float32),
        "w_fc": 0.02 * jax.random.normal(k3, (4 * C, C), jnp.float32),
        "w_mproj": 0.02 * jax.random.normal(k4, (C, 4 * C), jnp.float32),
    }

    out = transformer_block(x, params, n_head)
    out = jax.block_until_ready(out)

    ref = block_ref(x, params, n_head)
    assert out.shape == (B, T, C)
    err = float(jnp.max(jnp.abs(out - ref)))
    # Kernel runs matmuls with bf16 operands (f32 accumulation) -> loose tol vs f32 ref.
    assert jnp.allclose(out, ref, rtol=2e-2, atol=2e-2), f"max err {err}"
    print("KERNEL_OK")
</pallas_src>

<mosaic_0001>
module attributes {stable_mosaic.version = 11 : i64} {
  func.func @qkv_kernel(%arg0: i32, %arg1: i32, %arg2: memref<1x8x32xf32, #tpu.memory_space<vmem>>, %arg3: memref<1x32xf32, #tpu.memory_space<vmem>>, %arg4: memref<32x96xbf16, #tpu.memory_space<vmem>>, %arg5: memref<1x8x96xbf16, #tpu.memory_space<vmem>>) attributes {dimension_semantics = [#tpu.dimension_semantics<parallel>, #tpu.dimension_semantics<parallel>], iteration_bounds = array<i64: 2, 1>, scalar_prefetch = 0 : i64, scratch_operands = 0 : i64, tpu.core_type = #tpu.core_type<tc>, window_params = [{transform_indices = @transform_0, window_bounds = array<i64: 1, 8, 32>}, {pipeline_mode = #tpu.pipeline_mode<synchronous>, transform_indices = @transform_1, window_bounds = array<i64: 1, 32>}, {pipeline_mode = #tpu.pipeline_mode<synchronous>, transform_indices = @transform_2, window_bounds = array<i64: 32, 96>}, {transform_indices = @transform_3, window_bounds = array<i64: 1, 8, 96>}]} {
    %c0 = arith.constant 0 : index
    %c0_0 = arith.constant 0 : index
    %c0_1 = arith.constant 0 : index
    %0 = vector.load %arg2[%c0, %c0_0, %c0_1] : memref<1x8x32xf32, #tpu.memory_space<vmem>>, vector<1x8x32xf32>
    %1 = vector.shape_cast %0 : vector<1x8x32xf32> to vector<8x32xf32>
    %c0_2 = arith.constant 0 : index
    %c0_3 = arith.constant 0 : index
    %2 = vector.load %arg3[%c0_2, %c0_3] : memref<1x32xf32, #tpu.memory_space<vmem>>, vector<1x32xf32>
    %cst = arith.constant dense<0.000000e+00> : vector<8xf32>
    %3 = vector.multi_reduction <add>, %1, %cst [1] : vector<8x32xf32> to vector<8xf32>
    %4 = vector.shape_cast %3 : vector<8xf32> to vector<8x1xf32>
    %cst_4 = arith.constant 3.200000e+01 : f32
    %5 = vector.broadcast %cst_4 : f32 to vector<8x1xf32>
    %6 = arith.divf %4, %5 : vector<8x1xf32>
    %7 = vector.broadcast %6 : vector<8x1xf32> to vector<8x32xf32>
    %8 = arith.subf %1, %7 : vector<8x32xf32>
    %9 = arith.mulf %8, %8 : vector<8x32xf32>
    %cst_5 = arith.constant dense<0.000000e+00> : vector<8xf32>
    %10 = vector.multi_reduction <add>, %9, %cst_5 [1] : vector<8x32xf32> to vector<8xf32>
    %11 = vector.shape_cast %10 : vector<8xf32> to vector<8x1xf32>
    %cst_6 = arith.constant 3.200000e+01 : f32
    %12 = vector.broadcast %cst_6 : f32 to vector<8x1xf32>
    %13 = arith.divf %11, %12 : vector<8x1xf32>
    %cst_7 = arith.constant 9.99999974E-6 : f32
    %14 = vector.broadcast %cst_7 : f32 to vector<8x1xf32>
    %15 = arith.addf %13, %14 : vector<8x1xf32>
    %16 = math.rsqrt %15 : vector<8x1xf32>
    %17 = vector.broadcast %16 : vector<8x1xf32> to vector<8x32xf32>
    %18 = arith.mulf %8, %17 : vector<8x32xf32>
    %19 = vector.broadcast %2 : vector<1x32xf32> to vector<8x32xf32>
    %20 = arith.mulf %18, %19 : vector<8x32xf32>
    %21 = arith.truncf %20 : vector<8x32xf32> to vector<8x32xbf16>
    %c0_8 = arith.constant 0 : index
    %c0_9 = arith.constant 0 : index
    %22 = vector.load %arg4[%c0_8, %c0_9] : memref<32x96xbf16, #tpu.memory_space<vmem>>, vector<32x96xbf16>
    %cst_10 = arith.constant dense<0.000000e+00> : vector<8x96xf32>
    %23 = tpu.matmul %21, %22, %cst_10 {dimension_numbers = #tpu.dot_dimension_numbers<[1], [0], [0], [1], [0, 0, 1, 1], [], []>} : vector<8x32xbf16>, vector<32x96xbf16>, vector<8x96xf32> -> vector<8x96xf32>
    %24 = arith.truncf %23 : vector<8x96xf32> to vector<8x96xbf16>
    %c0_11 = arith.constant 0 : index
    %c0_12 = arith.constant 0 : index
    %c0_13 = arith.constant 0 : index
    %25 = vector.load %arg5[%c0_11, %c0_12, %c0_13] : memref<1x8x96xbf16, #tpu.memory_space<vmem>>, vector<1x8x96xbf16>
    %26 = vector.shape_cast %25 : vector<1x8x96xbf16> to vector<8x96xbf16>
    %27 = vector.shape_cast %24 : vector<8x96xbf16> to vector<1x8x96xbf16>
    tpu.vector_store %arg5[%c0_11, %c0_12, %c0_13], %27 {strides = array<i32>} : memref<1x8x96xbf16, #tpu.memory_space<vmem>>, vector<1x8x96xbf16>,
    return
  }
  func.func @transform_0(%arg0: i32, %arg1: i32) -> (i32, i32, i32) {
    %c0_i32 = arith.constant 0 : i32
    %c0_i32_0 = arith.constant 0 : i32
    return %arg0, %arg1, %c0_i32 : i32, i32, i32
  }
  func.func @transform_1(%arg0: i32, %arg1: i32) -> (i32, i32) {
    %c0_i32 = arith.constant 0 : i32
    %c0_i32_0 = arith.constant 0 : i32
    %c0_i32_1 = arith.constant 0 : i32
    return %c0_i32, %c0_i32_0 : i32, i32
  }
  func.func @transform_2(%arg0: i32, %arg1: i32) -> (i32, i32) {
    %c0_i32 = arith.constant 0 : i32
    %c0_i32_0 = arith.constant 0 : i32
    %c0_i32_1 = arith.constant 0 : i32
    return %c0_i32, %c0_i32_0 : i32, i32
  }
  func.func @transform_3(%arg0: i32, %arg1: i32) -> (i32, i32, i32) {
    %c0_i32 = arith.constant 0 : i32
    %c0_i32_0 = arith.constant 0 : i32
    return %arg0, %arg1, %c0_i32 : i32, i32, i32
  }
}

module attributes {stable_mosaic.version = 11 : i64} {
  func.func @flash_kernel(%arg0: i32, %arg1: i32, %arg2: i32, %arg3: i32, %arg4: memref<1x1x8x8xbf16, #tpu.memory_space<vmem>>, %arg5: memref<1x1x8x8xbf16, #tpu.memory_space<vmem>>, %arg6: memref<1x1x8x8xbf16, #tpu.memory_space<vmem>>, %arg7: memref<1x1x8x8xbf16, #tpu.memory_space<vmem>>, %arg8: memref<8x1xf32, #tpu.memory_space<vmem>>, %arg9: memref<8x1xf32, #tpu.memory_space<vmem>>, %arg10: memref<8x8xf32, #tpu.memory_space<vmem>>) attributes {dimension_semantics = [#tpu.dimension_semantics<parallel>, #tpu.dimension_semantics<parallel>, #tpu.dimension_semantics<parallel>, #tpu.dimension_semantics<arbitrary>], iteration_bounds = array<i64: 2, 4, 1, 1>, scalar_prefetch = 0 : i64, scratch_operands = 3 : i64, tpu.core_type = #tpu.core_type<tc>, window_params = [{transform_indices = @transform_0, window_bounds = array<i64: 1, 1, 8, 8>}, {transform_indices = @transform_1, window_bounds = array<i64: 1, 1, 8, 8>}, {transform_indices = @transform_2, window_bounds = array<i64: 1, 1, 8, 8>}, {transform_indices = @transform_3, window_bounds = array<i64: 1, 1, 8, 8>}]} {
    %c0_i32 = arith.constant 0 : i32
    %0 = arith.cmpi eq, %arg3, %c0_i32 : i32
    %1 = arith.extui %0 : i1 to i32
    %c0_i32_0 = arith.constant 0 : i32
    %2 = arith.cmpi ne, %1, %c0_i32_0 : i32
    scf.if %2 {
      %cst = arith.constant -1.000000e+30 : f32
      %12 = vector.broadcast %cst : f32 to vector<8x1xf32>
      %c0 = arith.constant 0 : index
      %c0_5 = arith.constant 0 : index
      %13 = vector.load %arg8[%c0, %c0_5] : memref<8x1xf32, #tpu.memory_space<vmem>>, vector<8x1xf32>
      tpu.vector_store %arg8[%c0, %c0_5], %12 {strides = array<i32>} : memref<8x1xf32, #tpu.memory_space<vmem>>, vector<8x1xf32>,
      %cst_6 = arith.constant 0.000000e+00 : f32
      %14 = vector.broadcast %cst_6 : f32 to vector<8x1xf32>
      %c0_7 = arith.constant 0 : index
      %c0_8 = arith.constant 0 : index
      %15 = vector.load %arg9[%c0_7, %c0_8] : memref<8x1xf32, #tpu.memory_space<vmem>>, vector<8x1xf32>
      tpu.vector_store %arg9[%c0_7, %c0_8], %14 {strides = array<i32>} : memref<8x1xf32, #tpu.memory_space<vmem>>, vector<8x1xf32>,
      %cst_9 = arith.constant 0.000000e+00 : f32
      %16 = vector.broadcast %cst_9 : f32 to vector<8x8xf32>
      %c0_10 = arith.constant 0 : index
      %c0_11 = arith.constant 0 : index
      %17 = vector.load %arg10[%c0_10, %c0_11] : memref<8x8xf32, #tpu.memory_space<vmem>>, vector<8x8xf32>
      tpu.vector_store %arg10[%c0_10, %c0_11], %16 {strides = array<i32>} : memref<8x8xf32, #tpu.memory_space<vmem>>, vector<8x8xf32>,
    } else {
    }
    %c8_i32 = arith.constant 8 : i32
    %3 = arith.muli %arg2, %c8_i32 : i32
    %c8_i32_1 = arith.constant 8 : i32
    %4 = arith.muli %arg3, %c8_i32_1 : i32
    %c7_i32 = arith.constant 7 : i32
    %5 = arith.addi %3, %c7_i32 : i32
    %6 = arith.cmpi sge, %5, %4 : i32
    %7 = arith.extui %6 : i1 to i32
    %c0_i32_2 = arith.constant 0 : i32
    %8 = arith.cmpi ne, %7, %c0_i32_2 : i32
    scf.if %8 {
      %c0 = arith.constant 0 : index
      %c0_5 = arith.constant 0 : index
      %c0_6 = arith.constant 0 : index
      %c0_7 = arith.constant 0 : index
      %12 = vector.load %arg4[%c0, %c0_5, %c0_6, %c0_7] : memref<1x1x8x8xbf16, #tpu.memory_space<vmem>>, vector<1x1x8x8xbf16>
      %13 = vector.shape_cast %12 : vector<1x1x8x8xbf16> to vector<8x8xbf16>
      %c0_8 = arith.constant 0 : index
      %c0_9 = arith.constant 0 : index
      %c0_10 = arith.constant 0 : index
      %c0_11 = arith.constant 0 : index
      %14 = vector.load %arg5[%c0_8, %c0_9, %c0_10, %c0_11] : memref<1x1x8x8xbf16, #tpu.memory_space<vmem>>, vector<1x1x8x8xbf16>
      %15 = vector.shape_cast %14 : vector<1x1x8x8xbf16> to vector<8x8xbf16>
      %cst = arith.constant dense<0.000000e+00> : vector<8x8xf32>
      %16 = tpu.matmul %13, %15, %cst {dimension_numbers = #tpu.dot_dimension_numbers<[1], [1], [0], [0], [0, 0, 1, 0], [], []>} : vector<8x8xbf16>, vector<8x8xbf16>, vector<8x8xf32> -> vector<8x8xf32>
      %cst_12 = arith.constant 0.353553385 : f32
      %17 = vector.broadcast %cst_12 : f32 to vector<8x8xf32>
      %18 = arith.mulf %16, %17 : vector<8x8xf32>
      %19 = tpu.iota {dimensions = array<i32: 0>} : vector<8x8xi32>
      %20 = vector.broadcast %3 : i32 to vector<8x8xi32>
      %21 = arith.addi %20, %19 : vector<8x8xi32>
      %22 = tpu.iota {dimensions = array<i32: 1>} : vector<8x8xi32>
      %23 = vector.broadcast %4 : i32 to vector<8x8xi32>
      %24 = arith.addi %23, %22 : vector<8x8xi32>
      %25 = arith.cmpi sle, %24, %21 : vector<8x8xi32>
      %cst_13 = arith.constant -1.000000e+30 : f32
      %26 = vector.broadcast %cst_13 : f32 to vector<8x8xf32>
      %27 = arith.select %25, %18, %26 : vector<8x8xi1>, vector<8x8xf32>
      %c0_14 = arith.constant 0 : index
      %c0_15 = arith.constant 0 : index
      %28 = vector.load %arg8[%c0_14, %c0_15] : memref<8x1xf32, #tpu.memory_space<vmem>>, vector<8x1xf32>
      %cst_16 = arith.constant dense<0xFF800000> : vector<8xf32>
      %29 = vector.multi_reduction <maximumf>, %27, %cst_16 [1] : vector<8x8xf32> to vector<8xf32>
      %30 = vector.shape_cast %29 : vector<8xf32> to vector<8x1xf32>
      %31 = arith.maximumf %28, %30 : vector<8x1xf32>
      %32 = arith.subf %28, %31 : vector<8x1xf32>
      %33 = math.exp %32 : vector<8x1xf32>
      %34 = vector.broadcast %31 : vector<8x1xf32> to vector<8x8xf32>
      %35 = arith.subf %27, %34 : vector<8x8xf32>
      %36 = math.exp %35 : vector<8x8xf32>
      %c0_17 = arith.constant 0 : index
      %c0_18 = arith.constant 0 : index
      %37 = vector.load %arg9[%c0_17, %c0_18] : memref<8x1xf32, #tpu.memory_space<vmem>>, vector<8x1xf32>
      %38 = arith.mulf %33, %37 : vector<8x1xf32>
      %cst_19 = arith.constant dense<0.000000e+00> : vector<8xf32>
      %39 = vector.multi_reduction <add>, %36, %cst_19 [1] : vector<8x8xf32> to vector<8xf32>
      %40 = vector.shape_cast %39 : vector<8xf32> to vector<8x1xf32>
      %41 = arith.addf %38, %40 : vector<8x1xf32>
      %c0_20 = arith.constant 0 : index
      %c0_21 = arith.constant 0 : index
      %42 = vector.load %arg9[%c0_20, %c0_21] : memref<8x1xf32, #tpu.memory_space<vmem>>, vector<8x1xf32>
      tpu.vector_store %arg9[%c0_20, %c0_21], %41 {strides = array<i32>} : memref<8x1xf32, #tpu.memory_space<vmem>>, vector<8x1xf32>,
      %c0_22 = arith.constant 0 : index
      %c0_23 = arith.constant 0 : index
      %43 = vector.load %arg10[%c0_22, %c0_23] : memref<8x8xf32, #tpu.memory_space<vmem>>, vector<8x8xf32>
      %44 = vector.broadcast %33 : vector<8x1xf32> to vector<8x8xf32>
      %45 = arith.mulf %44, %43 : vector<8x8xf32>
      %46 = arith.truncf %36 : vector<8x8xf32> to vector<8x8xbf16>
      %c0_24 = arith.constant 0 : index
      %c0_25 = arith.constant 0 : index
      %c0_26 = arith.constant 0 : index
      %c0_27 = arith.constant 0 : index
      %47 = vector.load %arg6[%c0_24, %c0_25, %c0_26, %c0_27] : memref<1x1x8x8xbf16, #tpu.memory_space<vmem>>, vector<1x1x8x8xbf16>
      %48 = vector.shape_cast %47 : vector<1x1x8x8xbf16> to vector<8x8xbf16>
      %cst_28 = arith.constant dense<0.000000e+00> : vector<8x8xf32>
      %49 = tpu.matmul %46, %48, %cst_28 {dimension_numbers = #tpu.dot_dimension_numbers<[1], [0], [0], [1], [0, 0, 1, 1], [], []>} : vector<8x8xbf16>, vector<8x8xbf16>, vector<8x8xf32> -> vector<8x8xf32>
      %50 = arith.addf %45, %49 : vector<8x8xf32>
      %c0_29 = arith.constant 0 : index
      %c0_30 = arith.constant 0 : index
      %51 = vector.load %arg10[%c0_29, %c0_30] : memref<8x8xf32, #tpu.memory_space<vmem>>, vector<8x8xf32>
      tpu.vector_store %arg10[%c0_29, %c0_30], %50 {strides = array<i32>} : memref<8x8xf32, #tpu.memory_space<vmem>>, vector<8x8xf32>,
      %c0_31 = arith.constant 0 : index
      %c0_32 = arith.constant 0 : index
      %52 = vector.load %arg8[%c0_31, %c0_32] : memref<8x1xf32, #tpu.memory_space<vmem>>, vector<8x1xf32>
      tpu.vector_store %arg8[%c0_31, %c0_32], %31 {strides = array<i32>} : memref<8x1xf32, #tpu.memory_space<vmem>>, vector<8x1xf32>,
    } else {
    }
    %c0_i32_3 = arith.constant 0 : i32
    %9 = arith.cmpi eq, %arg3, %c0_i32_3 : i32
    %10 = arith.extui %9 : i1 to i32
    %c0_i32_4 = arith.constant 0 : i32
    %11 = arith.cmpi ne, %10, %c0_i32_4 : i32
    scf.if %11 {
      %c0 = arith.constant 0 : index
      %c0_5 = arith.constant 0 : index
      %12 = vector.load %arg10[%c0, %c0_5] : memref<8x8xf32, #tpu.memory_space<vmem>>, vector<8x8xf32>
      %c0_6 = arith.constant 0 : index
      %c0_7 = arith.constant 0 : index
      %13 = vector.load %arg9[%c0_6, %c0_7] : memref<8x1xf32, #tpu.memory_space<vmem>>, vector<8x1xf32>
      %14 = tpu.reciprocal %13 {approx = true} : vector<8x1xf32> -> vector<8x1xf32>
      %15 = vector.broadcast %14 : vector<8x1xf32> to vector<8x8xf32>
      %16 = arith.mulf %12, %15 : vector<8x8xf32>
      %17 = arith.truncf %16 : vector<8x8xf32> to vector<8x8xbf16>
      %c0_8 = arith.constant 0 : index
      %c0_9 = arith.constant 0 : index
      %c0_10 = arith.constant 0 : index
      %c0_11 = arith.constant 0 : index
      %18 = vector.load %arg7[%c0_8, %c0_9, %c0_10, %c0_11] : memref<1x1x8x8xbf16, #tpu.memory_space<vmem>>, vector<1x1x8x8xbf16>
      %19 = vector.shape_cast %18 : vector<1x1x8x8xbf16> to vector<8x8xbf16>
      %20 = vector.shape_cast %17 : vector<8x8xbf16> to vector<1x1x8x8xbf16>
      tpu.vector_store %arg7[%c0_8, %c0_9, %c0_10, %c0_11], %20 {strides = array<i32>} : memref<1x1x8x8xbf16, #tpu.memory_space<vmem>>, vector<1x1x8x8xbf16>,
    } else {
    }
    return
  }
  func.func @transform_0(%arg0: i32, %arg1: i32, %arg2: i32, %arg3: i32) -> (i32, i32, i32, i32) {
    %c0_i32 = arith.constant 0 : i32
    %c0_i32_0 = arith.constant 0 : i32
    return %arg0, %arg1, %arg2, %c0_i32 : i32, i32, i32, i32
  }
  func.func @transform_1(%arg0: i32, %arg1: i32, %arg2: i32, %arg3: i32) -> (i32, i32, i32, i32) {
    %c0_i32 = arith.constant 0 : i32
    %c0_i32_0 = arith.constant 0 : i32
    return %arg0, %arg1, %arg3, %c0_i32 : i32, i32, i32, i32
  }
  func.func @transform_2(%arg0: i32, %arg1: i32, %arg2: i32, %arg3: i32) -> (i32, i32, i32, i32) {
    %c0_i32 = arith.constant 0 : i32
    %c0_i32_0 = arith.constant 0 : i32
    return %arg0, %arg1, %arg3, %c0_i32 : i32, i32, i32, i32
  }
  func.func @transform_3(%arg0: i32, %arg1: i32, %arg2: i32, %arg3: i32) -> (i32, i32, i32, i32) {
    %c0_i32 = arith.constant 0 : i32
    %c0_i32_0 = arith.constant 0 : i32
    return %arg0, %arg1, %arg2, %c0_i32 : i32, i32, i32, i32
  }
}

module attributes {stable_mosaic.version = 11 : i64} {
  func.func @proj_mlp_kernel(%arg0: i32, %arg1: i32, %arg2: i32, %arg3: memref<1x8x32xf32, #tpu.memory_space<vmem>>, %arg4: memref<1x8x32xbf16, #tpu.memory_space<vmem>>, %arg5: memref<32x32xbf16, #tpu.memory_space<vmem>>, %arg6: memref<1x32xf32, #tpu.memory_space<vmem>>, %arg7: memref<32x128xbf16, #tpu.memory_space<vmem>>, %arg8: memref<128x32xbf16, #tpu.memory_space<vmem>>, %arg9: memref<1x8x32xf32, #tpu.memory_space<vmem>>, %arg10: memref<8x32xf32, #tpu.memory_space<vmem>>, %arg11: memref<8x32xbf16, #tpu.memory_space<vmem>>, %arg12: memref<8x32xf32, #tpu.memory_space<vmem>>) attributes {dimension_semantics = [#tpu.dimension_semantics<parallel>, #tpu.dimension_semantics<parallel>, #tpu.dimension_semantics<arbitrary>], iteration_bounds = array<i64: 2, 1, 1>, scalar_prefetch = 0 : i64, scratch_operands = 3 : i64, tpu.core_type = #tpu.core_type<tc>, window_params = [{transform_indices = @transform_0, window_bounds = array<i64: 1, 8, 32>}, {transform_indices = @transform_1, window_bounds = array<i64: 1, 8, 32>}, {pipeline_mode = #tpu.pipeline_mode<synchronous>, transform_indices = @transform_2, window_bounds = array<i64: 32, 32>}, {pipeline_mode = #tpu.pipeline_mode<synchronous>, transform_indices = @transform_3, window_bounds = array<i64: 1, 32>}, {transform_indices = @transform_4, window_bounds = array<i64: 32, 128>}, {transform_indices = @transform_5, window_bounds = array<i64: 128, 32>}, {transform_indices = @transform_6, window_bounds = array<i64: 1, 8, 32>}]} {
    %c0_i32 = arith.constant 0 : i32
    %0 = arith.cmpi eq, %arg2, %c0_i32 : i32
    %1 = arith.extui %0 : i1 to i32
    %c0_i32_0 = arith.constant 0 : i32
    %2 = arith.cmpi ne, %1, %c0_i32_0 : i32
    scf.if %2 {
      %c0_17 = arith.constant 0 : index
      %c0_18 = arith.constant 0 : index
      %c0_19 = arith.constant 0 : index
      %28 = vector.load %arg4[%c0_17, %c0_18, %c0_19] : memref<1x8x32xbf16, #tpu.memory_space<vmem>>, vector<1x8x32xbf16>
      %29 = vector.shape_cast %28 : vector<1x8x32xbf16> to vector<8x32xbf16>
      %c0_20 = arith.constant 0 : index
      %c0_21 = arith.constant 0 : index
      %30 = vector.load %arg5[%c0_20, %c0_21] : memref<32x32xbf16, #tpu.memory_space<vmem>>, vector<32x32xbf16>
      %cst_22 = arith.constant dense<0.000000e+00> : vector<8x32xf32>
      %31 = tpu.matmul %29, %30, %cst_22 {dimension_numbers = #tpu.dot_dimension_numbers<[1], [0], [0], [1], [0, 0, 1, 1], [], []>} : vector<8x32xbf16>, vector<32x32xbf16>, vector<8x32xf32> -> vector<8x32xf32>
      %c0_23 = arith.constant 0 : index
      %c0_24 = arith.constant 0 : index
      %c0_25 = arith.constant 0 : index
      %32 = vector.load %arg3[%c0_23, %c0_24, %c0_25] : memref<1x8x32xf32, #tpu.memory_space<vmem>>, vector<1x8x32xf32>
      %33 = vector.shape_cast %32 : vector<1x8x32xf32> to vector<8x32xf32>
      %34 = arith.addf %33, %31 : vector<8x32xf32>
      %c0_26 = arith.constant 0 : index
      %c0_27 = arith.constant 0 : index
      %35 = vector.load %arg10[%c0_26, %c0_27] : memref<8x32xf32, #tpu.memory_space<vmem>>, vector<8x32xf32>
      tpu.vector_store %arg10[%c0_26, %c0_27], %34 {strides = array<i32>} : memref<8x32xf32, #tpu.memory_space<vmem>>, vector<8x32xf32>,
      %c0_28 = arith.constant 0 : index
      %c0_29 = arith.constant 0 : index
      %36 = vector.load %arg6[%c0_28, %c0_29] : memref<1x32xf32, #tpu.memory_space<vmem>>, vector<1x32xf32>
      %cst_30 = arith.constant dense<0.000000e+00> : vector<8xf32>
      %37 = vector.multi_reduction <add>, %34, %cst_30 [1] : vector<8x32xf32> to vector<8xf32>
      %38 = vector.shape_cast %37 : vector<8xf32> to vector<8x1xf32>
      %cst_31 = arith.constant 3.200000e+01 : f32
      %39 = vector.broadcast %cst_31 : f32 to vector<8x1xf32>
      %40 = arith.divf %38, %39 : vector<8x1xf32>
      %41 = vector.broadcast %40 : vector<8x1xf32> to vector<8x32xf32>
      %42 = arith.subf %34, %41 : vector<8x32xf32>
      %43 = arith.mulf %42, %42 : vector<8x32xf32>
      %cst_32 = arith.constant dense<0.000000e+00> : vector<8xf32>
      %44 = vector.multi_reduction <add>, %43, %cst_32 [1] : vector<8x32xf32> to vector<8xf32>
      %45 = vector.shape_cast %44 : vector<8xf32> to vector<8x1xf32>
      %cst_33 = arith.constant 3.200000e+01 : f32
      %46 = vector.broadcast %cst_33 : f32 to vector<8x1xf32>
      %47 = arith.divf %45, %46 : vector<8x1xf32>
      %cst_34 = arith.constant 9.99999974E-6 : f32
      %48 = vector.broadcast %cst_34 : f32 to vector<8x1xf32>
      %49 = arith.addf %47, %48 : vector<8x1xf32>
      %50 = math.rsqrt %49 : vector<8x1xf32>
      %51 = vector.broadcast %50 : vector<8x1xf32> to vector<8x32xf32>
      %52 = arith.mulf %42, %51 : vector<8x32xf32>
      %53 = vector.broadcast %36 : vector<1x32xf32> to vector<8x32xf32>
      %54 = arith.mulf %52, %53 : vector<8x32xf32>
      %55 = arith.truncf %54 : vector<8x32xf32> to vector<8x32xbf16>
      %c0_35 = arith.constant 0 : index
      %c0_36 = arith.constant 0 : index
      %56 = vector.load %arg11[%c0_35, %c0_36] : memref<8x32xbf16, #tpu.memory_space<vmem>>, vector<8x32xbf16>
      tpu.vector_store %arg11[%c0_35, %c0_36], %55 {strides = array<i32>} : memref<8x32xbf16, #tpu.memory_space<vmem>>, vector<8x32xbf16>,
      %cst_37 = arith.constant 0.000000e+00 : f32
      %57 = vector.broadcast %cst_37 : f32 to vector<8x32xf32>
      %c0_38 = arith.constant 0 : index
      %c0_39 = arith.constant 0 : index
      %58 = vector.load %arg12[%c0_38, %c0_39] : memref<8x32xf32, #tpu.memory_space<vmem>>, vector<8x32xf32>
      tpu.vector_store %arg12[%c0_38, %c0_39], %57 {strides = array<i32>} : memref<8x32xf32, #tpu.memory_space<vmem>>, vector<8x32xf32>,
    } else {
    }
    %c0 = arith.constant 0 : index
    %c0_1 = arith.constant 0 : index
    %3 = vector.load %arg11[%c0, %c0_1] : memref<8x32xbf16, #tpu.memory_space<vmem>>, vector<8x32xbf16>
    %c0_2 = arith.constant 0 : index
    %c0_3 = arith.constant 0 : index
    %4 = vector.load %arg7[%c0_2, %c0_3] : memref<32x128xbf16, #tpu.memory_space<vmem>>, vector<32x128xbf16>
    %cst = arith.constant dense<0.000000e+00> : vector<8x128xf32>
    %5 = tpu.matmul %3, %4, %cst {dimension_numbers = #tpu.dot_dimension_numbers<[1], [0], [0], [1], [0, 0, 1, 1], [], []>} : vector<8x32xbf16>, vector<32x128xbf16>, vector<8x128xf32> -> vector<8x128xf32>
    %cst_4 = arith.constant 5.000000e-01 : f32
    %6 = vector.broadcast %cst_4 : f32 to vector<8x128xf32>
    %7 = arith.mulf %6, %5 : vector<8x128xf32>
    %cst_5 = arith.constant 4.471500e-02 : f32
    %8 = vector.broadcast %cst_5 : f32 to vector<8x128xf32>
    %9 = arith.mulf %8, %5 : vector<8x128xf32>
    %10 = arith.mulf %9, %5 : vector<8x128xf32>
    %11 = arith.mulf %10, %5 : vector<8x128xf32>
    %12 = arith.addf %5, %11 : vector<8x128xf32>
    %cst_6 = arith.constant 0.797884583 : f32
    %13 = vector.broadcast %cst_6 : f32 to vector<8x128xf32>
    %14 = arith.mulf %13, %12 : vector<8x128xf32>
    %15 = math.tanh %14 : vector<8x128xf32>
    %cst_7 = arith.constant 1.000000e+00 : f32
    %16 = vector.broadcast %cst_7 : f32 to vector<8x128xf32>
    %17 = arith.addf %16, %15 : vector<8x128xf32>
    %18 = arith.mulf %7, %17 : vector<8x128xf32>
    %19 = arith.truncf %18 : vector<8x128xf32> to vector<8x128xbf16>
    %c0_8 = arith.constant 0 : index
    %c0_9 = arith.constant 0 : index
    %20 = vector.load %arg12[%c0_8, %c0_9] : memref<8x32xf32, #tpu.memory_space<vmem>>, vector<8x32xf32>
    %c0_10 = arith.constant 0 : index
    %c0_11 = arith.constant 0 : index
    %21 = vector.load %arg8[%c0_10, %c0_11] : memref<128x32xbf16, #tpu.memory_space<vmem>>, vector<128x32xbf16>
    %cst_12 = arith.constant dense<0.000000e+00> : vector<8x32xf32>
    %22 = tpu.matmul %19, %21, %cst_12 {dimension_numbers = #tpu.dot_dimension_numbers<[1], [0], [0], [1], [0, 0, 1, 1], [], []>} : vector<8x128xbf16>, vector<128x32xbf16>, vector<8x32xf32> -> vector<8x32xf32>
    %23 = arith.addf %20, %22 : vector<8x32xf32>
    %c0_13 = arith.constant 0 : index
    %c0_14 = arith.constant 0 : index
    %24 = vector.load %arg12[%c0_13, %c0_14] : memref<8x32xf32, #tpu.memory_space<vmem>>, vector<8x32xf32>
    tpu.vector_store %arg12[%c0_13, %c0_14], %23 {strides = array<i32>} : memref<8x32xf32, #tpu.memory_space<vmem>>, vector<8x32xf32>,
    %c0_i32_15 = arith.constant 0 : i32
    %25 = arith.cmpi eq, %arg2, %c0_i32_15 : i32
    %26 = arith.extui %25 : i1 to i32
    %c0_i32_16 = arith.constant 0 : i32
    %27 = arith.cmpi ne, %26, %c0_i32_16 : i32
    scf.if %27 {
      %c0_17 = arith.constant 0 : index
      %c0_18 = arith.constant 0 : index
      %28 = vector.load %arg10[%c0_17, %c0_18] : memref<8x32xf32, #tpu.memory_space<vmem>>, vector<8x32xf32>
      %c0_19 = arith.constant 0 : index
      %c0_20 = arith.constant 0 : index
      %29 = vector.load %arg12[%c0_19, %c0_20] : memref<8x32xf32, #tpu.memory_space<vmem>>, vector<8x32xf32>
      %30 = arith.addf %28, %29 : vector<8x32xf32>
      %c0_21 = arith.constant 0 : index
      %c0_22 = arith.constant 0 : index
      %c0_23 = arith.constant 0 : index
      %31 = vector.load %arg9[%c0_21, %c0_22, %c0_23] : memref<1x8x32xf32, #tpu.memory_space<vmem>>, vector<1x8x32xf32>
      %32 = vector.shape_cast %31 : vector<1x8x32xf32> to vector<8x32xf32>
      %33 = vector.shape_cast %30 : vector<8x32xf32> to vector<1x8x32xf32>
      tpu.vector_store %arg9[%c0_21, %c0_22, %c0_23], %33 {strides = array<i32>} : memref<1x8x32xf32, #tpu.memory_space<vmem>>, vector<1x8x32xf32>,
    } else {
    }
    return
  }
  func.func @transform_0(%arg0: i32, %arg1: i32, %arg2: i32) -> (i32, i32, i32) {
    %c0_i32 = arith.constant 0 : i32
    %c0_i32_0 = arith.constant 0 : i32
    return %arg0, %arg1, %c0_i32 : i32, i32, i32
  }
  func.func @transform_1(%arg0: i32, %arg1: i32, %arg2: i32) -> (i32, i32, i32) {
    %c0_i32 = arith.constant 0 : i32
    %c0_i32_0 = arith.constant 0 : i32
    return %arg0, %arg1, %c0_i32 : i32, i32, i32
  }
  func.func @transform_2(%arg0: i32, %arg1: i32, %arg2: i32) -> (i32, i32) {
    %c0_i32 = arith.constant 0 : i32
    %c0_i32_0 = arith.constant 0 : i32
    %c0_i32_1 = arith.constant 0 : i32
    return %c0_i32, %c0_i32_0 : i32, i32
  }
  func.func @transform_3(%arg0: i32, %arg1: i32, %arg2: i32) -> (i32, i32) {
    %c0_i32 = arith.constant 0 : i32
    %c0_i32_0 = arith.constant 0 : i32
    %c0_i32_1 = arith.constant 0 : i32
    return %c0_i32, %c0_i32_0 : i32, i32
  }
  func.func @transform_4(%arg0: i32, %arg1: i32, %arg2: i32) -> (i32, i32) {
    %c0_i32 = arith.constant 0 : i32
    %c0_i32_0 = arith.constant 0 : i32
    return %c0_i32, %arg2 : i32, i32
  }
  func.func @transform_5(%arg0: i32, %arg1: i32, %arg2: i32) -> (i32, i32) {
    %c0_i32 = arith.constant 0 : i32
    %c0_i32_0 = arith.constant 0 : i32
    return %arg2, %c0_i32 : i32, i32
  }
  func.func @transform_6(%arg0: i32, %arg1: i32, %arg2: i32) -> (i32, i32, i32) {
    %c0_i32 = arith.constant 0 : i32
    %c0_i32_0 = arith.constant 0 : i32
    return %arg0, %arg1, %c0_i32 : i32, i32, i32
  }
}

</mosaic_0001>

<llo_original>
// kernel: transformer_block.4
$region0: #{transformer_block.4}
  #allocation0 [shape = 'u32[]', space=smem, size = 0x4, offset = 0x4, fixed_abs, tag = 'smem constant byte address 0x4 - core index']
  #allocation1 [shape = 'u32[72,128]{1,0:T(1,128)}', space=vmem, size = 0x9000, scoped, tag = 'internal scratch']
  #allocation2 [shape = 'f32[8,1]{1,0:T(8,128)}', space=vmem, size = 0x1000, scoped, tag = 'scratch operand']
  #allocation3 [shape = 'f32[8,1]{1,0:T(8,128)}', space=vmem, size = 0x1000, scoped, tag = 'scratch operand']
  #allocation4 [shape = 'f32[8,8]{1,0:T(8,128)}', space=vmem, size = 0x1000, scoped, tag = 'scratch operand']
  %s0 = inlined_call_operand.vmem [shape: bf16[2,4,8,8], index: 0, kind: input, shape index: {}]
  %s1 = inlined_call_operand.vmem [shape: bf16[2,4,8,8], index: 1, kind: input, shape index: {}]
  %s2 = inlined_call_operand.vmem [shape: bf16[2,4,8,8], index: 2, kind: input, shape index: {}]
  %s3 = inlined_call_operand.vmem [shape: bf16[2,4,8,8], index: 3, kind: output, shape index: {}]
  %s4 = sld [smem:[#allocation0]]
  $region57: #{transformer_block.4} parent=0
    _
  %s6 = ssub.s32 1, %s4
  %s7 = scalar_select 0, %s6, %s4
  loop: start=0, step=1, limit=10
  $region2: #{transformer_block.4} parent=0 // loop_pre_header
    _
  $region3: #{transformer_block.4} parent=0 // loop_header
    %s9 = sphi 0, %s13
    %p10 = scmp.ge.s32.totalorder %s9, 10
    %s16 = sphi 0, %s42
    %s17 = sphi 0, %s38
    %s18 = sphi 0, %s34
    %s19 = sphi 0, %s30
    %s20 = sphi 0, %s16
    %s21 = sphi 0, %s17
    %s22 = sphi 0, %s18
    %s23 = sphi 0, %s19
    %s24 = sphi 0, %s20
    %s25 = sphi 0, %s21
    %s26 = sphi 0, %s22
    %s27 = sphi 0, %s23
    %s49 = sphi 0, %s51
    %s52 = sphi 0, %s49
    %s53 = sphi 0, %s52
    %s69 = sphi 0, %s53
    %s79 = sphi 0, %s81
    %s82 = sphi 0, %s79
    %s83 = sphi 0, %s82
    %s99 = sphi 0, %s83
    %s109 = sphi 0, %s111
    %s112 = sphi 0, %s109
    %s113 = sphi 0, %s112
    %s129 = sphi 0, %s113
    %s139 = sphi 0, %s141
    %s142 = sphi 0, %s139
    %s143 = sphi 0, %s142
    %s159 = sphi 0, %s143
  $region4: #{transformer_block.4} parent=0 // loop_header_branch
    %12 = sbr.rel (%p10) target = $region8
  $region5: #{transformer_block.4} parent=0 // loop_body
    %s14 = ssub.s32 %s9, 1
    %s15 = ssub.s32 %s9, 2
    %s28 = sadd.s32 1, %s19
    %p29 = scmp.ge.s32.totalorder %s28, 1
    %s30 = scalar_select %p29, 0, %s28
    %s31 = sadd.s32 1, %s18
    %s32 = scalar_select %p29, %s31, %s18
    %p33 = scmp.ge.s32.totalorder %s32, 1
    %s34 = scalar_select %p33, 0, %s32
    %s35 = sadd.s32 1, %s17
    %s36 = scalar_select %p33, %s35, %s17
    %p37 = scmp.ge.s32.totalorder %s36, 4
    %s38 = scalar_select %p37, 0, %s36
    %s39 = sadd.s32 1, %s16
    %s40 = scalar_select %p37, %s39, %s16
    %p41 = scmp.ge.s32.totalorder %s40, 2
    %s42 = scalar_select %p41, 0, %s40
    %s43 = ssub.s32 %s16, %s42
    %s44 = ssub.s32 %s17, %s38
    %s45 = sor.u32 %s43, %s44
    %s46 = ssub.s32 %s18, %s34
    %s47 = sor.u32 %s45, %s46
    %p48 = scmp.eq.s32.totalorder %s47, 0
    %s50 = sadd.s32 %s49, 1
    %s51 = scalar_select %p48, %s49, %s50
    %p54 = pneg %p48
    %p55 = scmp.eq.s32.totalorder %s9, 7
    %p56 = por %p54, %p55
    %p57 = scmp.ne.s32.totalorder %s49, %s52
    %p58 = scmp.eq.s32.totalorder %s9, 0
    %p59 = por %p57, %p58
    %p60 = scmp.ne.s32.totalorder %s49, %s52
    %p61 = scmp.eq.s32.totalorder %s14, 7
    %p62 = por %p60, %p61
    %p63 = scmp.ne.s32.totalorder %s52, %s53
    %p64 = scmp.eq.s32.totalorder %s14, 0
    %p65 = por %p63, %p64
    %p66 = scmp.ne.s32.totalorder %s52, %s53
    %p67 = scmp.eq.s32.totalorder %s15, 7
    %p68 = por %p66, %p67
    %p70 = scmp.ne.s32.totalorder %s53, %s69
    %p71 = scmp.eq.s32.totalorder %s15, 0
    %p72 = por %p70, %p71
    %s73 = ssub.s32 %s16, %s42
    %s74 = ssub.s32 %s17, %s38
    %s75 = sor.u32 %s73, %s74
    %s76 = ssub.s32 %s19, %s30
    %s77 = sor.u32 %s75, %s76
    %p78 = scmp.eq.s32.totalorder %s77, 0
    %s80 = sadd.s32 %s79, 1
    %s81 = scalar_select %p78, %s79, %s80
    %p84 = pneg %p78
    %p85 = scmp.eq.s32.totalorder %s9, 7
    %p86 = por %p84, %p85
    %p87 = scmp.ne.s32.totalorder %s79, %s82
    %p88 = scmp.eq.s32.totalorder %s9, 0
    %p89 = por %p87, %p88
    %p90 = scmp.ne.s32.totalorder %s79, %s82
    %p91 = scmp.eq.s32.totalorder %s14, 7
    %p92 = por %p90, %p91
    %p93 = scmp.ne.s32.totalorder %s82, %s83
    %p94 = scmp.eq.s32.totalorder %s14, 0
    %p95 = por %p93, %p94
    %p96 = scmp.ne.s32.totalorder %s82, %s83
    %p97 = scmp.eq.s32.totalorder %s15, 7
    %p98 = por %p96, %p97
    %p100 = scmp.ne.s32.totalorder %s83, %s99
    %p101 = scmp.eq.s32.totalorder %s15, 0
    %p102 = por %p100, %p101
    %s103 = ssub.s32 %s16, %s42
    %s104 = ssub.s32 %s17, %s38
    %s105 = sor.u32 %s103, %s104
    %s106 = ssub.s32 %s19, %s30
    %s107 = sor.u32 %s105, %s106
    %p108 = scmp.eq.s32.totalorder %s107, 0
    %s110 = sadd.s32 %s109, 1
    %s111 = scalar_select %p108, %s109, %s110
    %p114 = pneg %p108
    %p115 = scmp.eq.s32.totalorder %s9, 7
    %p116 = por %p114, %p115
    %p117 = scmp.ne.s32.totalorder %s109, %s112
    %p118 = scmp.eq.s32.totalorder %s9, 0
    %p119 = por %p117, %p118
    %p120 = scmp.ne.s32.totalorder %s109, %s112
    %p121 = scmp.eq.s32.totalorder %s14, 7
    %p122 = por %p120, %p121
    %p123 = scmp.ne.s32.totalorder %s112, %s113
    %p124 = scmp.eq.s32.totalorder %s14, 0
    %p125 = por %p123, %p124
    %p126 = scmp.ne.s32.totalorder %s112, %s113
    %p127 = scmp.eq.s32.totalorder %s15, 7
    %p128 = por %p126, %p127
    %p130 = scmp.ne.s32.totalorder %s113, %s129
    %p131 = scmp.eq.s32.totalorder %s15, 0
    %p132 = por %p130, %p131
    %s133 = ssub.s32 %s16, %s42
    %s134 = ssub.s32 %s17, %s38
    %s135 = sor.u32 %s133, %s134
    %s136 = ssub.s32 %s18, %s34
    %s137 = sor.u32 %s135, %s136
    %p138 = scmp.eq.s32.totalorder %s137, 0
    %s140 = sadd.s32 %s139, 1
    %s141 = scalar_select %p138, %s139, %s140
    %p144 = pneg %p138
    %p145 = scmp.eq.s32.totalorder %s9, 7
    %p146 = por %p144, %p145
    %p147 = scmp.ne.s32.totalorder %s139, %s142
    %p148 = scmp.eq.s32.totalorder %s9, 0
    %p149 = por %p147, %p148
    %p150 = scmp.ne.s32.totalorder %s139, %s142
    %p151 = scmp.eq.s32.totalorder %s14, 7
    %p152 = por %p150, %p151
    %p153 = scmp.ne.s32.totalorder %s142, %s143
    %p154 = scmp.eq.s32.totalorder %s14, 0
    %p155 = por %p153, %p154
    %p156 = scmp.ne.s32.totalorder %s142, %s143
    %p157 = scmp.eq.s32.totalorder %s15, 7
    %p158 = por %p156, %p157
    %p160 = scmp.ne.s32.totalorder %s143, %s159
    %p161 = scmp.eq.s32.totalorder %s15, 0
    %p162 = por %p160, %p161
    %p163 = scmp.le.s32.totalorder 1, %s9
    %p164 = scmp.lt.s32.totalorder %s9, 9
    %p165 = pnand %p163, %p164
    %p166 = pneg %p165
    // Predicated region
    $region9: #{transformer_block.4} parent=5 // pred_check
      _
    $region10: #{transformer_block.4} parent=5 // pred_check_branch
      %168 = sbr.rel (%p165) target = $region12
    $region11: #{transformer_block.4} parent=5 // pred_region
      %s169 = ssub.s32 %s9, 1
    $region12: #{transformer_block.4} parent=5 // pred_fallthru
      _
    %p170 = scmp.lt.s32.totalorder %s9, 8
    // Predicated region
    $region13: #{transformer_block.4} parent=5 // pred_check
      %p171 = pneg %p170
    $region14: #{transformer_block.4} parent=5 // pred_check_branch
      %173 = sbr.rel (%p171) target = $region16
    $region15: #{transformer_block.4} parent=5 // pred_region
      // Predicated region
      $region17: #{transformer_block.4} parent=15 // pred_check
        %p174 = pneg %p59
      $region18: #{transformer_block.4} parent=15 // pred_check_branch
        %176 = sbr.rel (%p174) target = $region20
      $region19: #{transformer_block.4} parent=15 // pred_region
        %p177 = scmp.lt.s32.totalorder %s16, 1
        %s178 = scalar_select %p177, %s16, 1
        %p179 = scmp.lt.s32.totalorder %s17, 3
        %s180 = scalar_select %p179, %s17, 3
        %p181 = scmp.lt.s32.totalorder %s18, 0
        %s182 = scalar_select %p181, %s18, 0
        %s183 = sadd.s32 %s182, %s180
        %s184 = smul.addr %s178, 4
        %s185 = sadd.s32 %s183, %s184
        %s186 = smul.addr %s185, 4
        %s187 = scalar_lea.vmem %s0, %s186
      $region20: #{transformer_block.4} parent=15 // pred_fallthru
        _
      // Predicated region
      $region21: #{transformer_block.4} parent=15 // pred_check
        %p188 = pneg %p89
      $region22: #{transformer_block.4} parent=15 // pred_check_branch
        %190 = sbr.rel (%p188) target = $region24
      $region23: #{transformer_block.4} parent=15 // pred_region
        %p191 = scmp.lt.s32.totalorder %s16, 1
        %s192 = scalar_select %p191, %s16, 1
        %p193 = scmp.lt.s32.totalorder %s17, 3
        %s194 = scalar_select %p193, %s17, 3
        %p195 = scmp.lt.s32.totalorder %s19, 0
        %s196 = scalar_select %p195, %s19, 0
        %s197 = sadd.s32 %s196, %s194
        %s198 = smul.addr %s192, 4
        %s199 = sadd.s32 %s197, %s198
        %s200 = smul.addr %s199, 4
        %s201 = scalar_lea.vmem %s1, %s200
      $region24: #{transformer_block.4} parent=15 // pred_fallthru
        _
      // Predicated region
      $region25: #{transformer_block.4} parent=15 // pred_check
        %p202 = pneg %p119
      $region26: #{transformer_block.4} parent=15 // pred_check_branch
        %204 = sbr.rel (%p202) target = $region28
      $region27: #{transformer_block.4} parent=15 // pred_region
        %p205 = scmp.lt.s32.totalorder %s16, 1
        %s206 = scalar_select %p205, %s16, 1
        %p207 = scmp.lt.s32.totalorder %s17, 3
        %s208 = scalar_select %p207, %s17, 3
        %p209 = scmp.lt.s32.totalorder %s19, 0
        %s210 = scalar_select %p209, %s19, 0
        %s211 = sadd.s32 %s210, %s208
        %s212 = smul.addr %s206, 4
        %s213 = sadd.s32 %s211, %s212
        %s214 = smul.addr %s213, 4
        %s215 = scalar_lea.vmem %s2, %s214
      $region28: #{transformer_block.4} parent=15 // pred_fallthru
        _
    $region16: #{transformer_block.4} parent=5 // pred_fallthru
      _
    %p216 = scmp.le.s32.totalorder 1, %s9
    %p217 = scmp.lt.s32.totalorder %s9, 9
    %p218 = pnand %p216, %p217
    %p219 = pneg %p218
    // Predicated region
    $region29: #{transformer_block.4} parent=5 // pred_check
      _
    $region30: #{transformer_block.4} parent=5 // pred_check_branch
      %221 = sbr.rel (%p218) target = $region32
    $region31: #{transformer_block.4} parent=5 // pred_region
      %s222 = ssub.s32 %s9, 1
      %p223 = scmp.lt.s32.totalorder %s20, 1
      %s224 = scalar_select %p223, %s20, 1
      %p225 = scmp.lt.s32.totalorder %s21, 3
      %s226 = scalar_select %p225, %s21, 3
      %p227 = scmp.lt.s32.totalorder %s22, 0
      %s228 = scalar_select %p227, %s22, 0
      %s229 = sadd.s32 %s228, %s226
      %s230 = smul.addr %s224, 4
      %s231 = sadd.s32 %s229, %s230
      %s232 = smul.addr %s231, 4
      %s233 = scalar_lea.vmem %s0, %s232
      %p234 = pneg %p65
      %p235 = pneg %p62
      %p236 = scmp.lt.s32.totalorder %s20, 1
      %s237 = scalar_select %p236, %s20, 1
      %p238 = scmp.lt.s32.totalorder %s21, 3
      %s239 = scalar_select %p238, %s21, 3
      %p240 = scmp.lt.s32.totalorder %s23, 0
      %s241 = scalar_select %p240, %s23, 0
      %s242 = sadd.s32 %s241, %s239
      %s243 = smul.addr %s237, 4
      %s244 = sadd.s32 %s242, %s243
      %s245 = smul.addr %s244, 4
      %s246 = scalar_lea.vmem %s1, %s245
      %p247 = pneg %p95
      %p248 = pneg %p92
      %p249 = scmp.lt.s32.totalorder %s20, 1
      %s250 = scalar_select %p249, %s20, 1
      %p251 = scmp.lt.s32.totalorder %s21, 3
      %s252 = scalar_select %p251, %s21, 3
      %p253 = scmp.lt.s32.totalorder %s23, 0
      %s254 = scalar_select %p253, %s23, 0
      %s255 = sadd.s32 %s254, %s252
      %s256 = smul.addr %s250, 4
      %s257 = sadd.s32 %s255, %s256
      %s258 = smul.addr %s257, 4
      %s259 = scalar_lea.vmem %s2, %s258
      %p260 = pneg %p125
      %p261 = pneg %p122
      %p262 = pneg %p155
      %p263 = pneg %p152
      %p264 = scmp.lt.s32.totalorder %s20, 1
      %s265 = scalar_select %p264, %s20, 1
      %p266 = scmp.lt.s32.totalorder %s21, 3
      %s267 = scalar_select %p266, %s21, 3
      %p268 = scmp.lt.s32.totalorder %s22, 0
      %s269 = scalar_select %p268, %s22, 0
      %s270 = sadd.s32 %s269, %s267
      %s271 = smul.addr %s265, 4
      %s272 = sadd.s32 %s270, %s271
      %s273 = smul.addr %s272, 4
      %s274 = scalar_lea.vmem %s3, %s273
      %p275 = scmp.lt.s32.totalorder %s20, 1
      %s276 = scalar_select %p275, %s20, 1
      %p277 = scmp.lt.s32.totalorder %s21, 3
      %s278 = scalar_select %p277, %s21, 3
      %p279 = scmp.lt.s32.totalorder %s22, 0
      %s280 = scalar_select %p279, %s22, 0
      %s281 = sadd.s32 %s280, %s278
      %s282 = smul.addr %s276, 4
      %s283 = sadd.s32 %s281, %s282
      %s284 = smul.addr %s283, 4
      %s285 = scalar_lea.vmem %s0, %s284
      %p286 = scmp.lt.s32.totalorder %s20, 1
      %s287 = scalar_select %p286, %s20, 1
      %p288 = scmp.lt.s32.totalorder %s21, 3
      %s289 = scalar_select %p288, %s21, 3
      %p290 = scmp.lt.s32.totalorder %s23, 0
      %s291 = scalar_select %p290, %s23, 0
      %s292 = sadd.s32 %s291, %s289
      %s293 = smul.addr %s287, 4
      %s294 = sadd.s32 %s292, %s293
      %s295 = smul.addr %s294, 4
      %s296 = scalar_lea.vmem %s1, %s295
      %p297 = scmp.lt.s32.totalorder %s20, 1
      %s298 = scalar_select %p297, %s20, 1
      %p299 = scmp.lt.s32.totalorder %s21, 3
      %s300 = scalar_select %p299, %s21, 3
      %p301 = scmp.lt.s32.totalorder %s23, 0
      %s302 = scalar_select %p301, %s23, 0
      %s303 = sadd.s32 %s302, %s300
      %s304 = smul.addr %s298, 4
      %s305 = sadd.s32 %s303, %s304
      %s306 = smul.addr %s305, 4
      %s307 = scalar_lea.vmem %s2, %s306
      %p308 = scmp.lt.s32.totalorder %s20, 1
      %s309 = scalar_select %p308, %s20, 1
      %p310 = scmp.lt.s32.totalorder %s21, 3
      %s311 = scalar_select %p310, %s21, 3
      %p312 = scmp.lt.s32.totalorder %s22, 0
      %s313 = scalar_select %p312, %s22, 0
      %s314 = sadd.s32 %s313, %s311
      %s315 = smul.addr %s309, 4
      %s316 = sadd.s32 %s314, %s315
      %s317 = smul.addr %s316, 4
      %s318 = scalar_lea.vmem %s3, %s317
      %p320 = scmp.eq.s32.totalorder %s23, 0
      // Predicated region
      $region33: #{transformer_block.4} parent=31 // pred_check
        %p321 = pneg %p320
      $region34: #{transformer_block.4} parent=31 // pred_check_branch
        %323 = sbr.rel (%p321) target = $region36
      $region35: #{transformer_block.4} parent=31 // pred_region
        %vm324 = vcmask 7168
        %325 = vst.msk [vmem:[#allocation2] sm:$0xff] %vm324, -1e+30
        %326 = vst.msk [vmem:[#allocation3] sm:$0xff] %vm324, 0.0
        %vm327 = vcmask 64512
        %328 = vst.msk [vmem:[#allocation4] sm:$0xff] %vm327, 0.0
      $region36: #{transformer_block.4} parent=31 // pred_fallthru
        _
      %s329 = smul.u32 %s22, 8
      %s330 = smul.u32 %s23, 8
      %s331 = sadd.s32 %s329, 7
      %p332 = scmp.ge.s32.totalorder %s331, %s330
      // Predicated region
      $region37: #{transformer_block.4} parent=31 // pred_check
        %p333 = pneg %p332
      $region38: #{transformer_block.4} parent=31 // pred_check_branch
        %335 = sbr.rel (%p333) target = $region40
      $region39: #{transformer_block.4} parent=31 // pred_region
        %v336 = vld [vmem:[%s285] sm:$0xf]
        %v337 = vld [vmem:[%s296] sm:$0xf]
        %vm338 = vcmask 64512
        %v340 = vsel %vm338, %v336, 0
        %v343 = vsel %vm338, %v337, 0
        %345 = vmatpush.bf16.xpose.msra.mxu0 0
        %346 = vmatpush.bf16.xpose.msra.mxu0 0
        %347 = vmatpush.bf16.xpose.msra.mxu0 0
        %348 = vmatpush.bf16.xpose.msra.mxu0 0
        %349 = vmatpush.bf16.xpose.msra.mxu0 0
        %350 = vmatpush.bf16.xpose.msra.mxu0 0
        %351 = vmatpush.bf16.xpose.msra.mxu0 0
        %352 = vmatpush.bf16.xpose.msra.mxu0 %v343
        %353 = vmatmul.bf16.gmra.mxu0 %v340
        %v354 = vpop.f32.mrf.mxu0
        %v355 = vadd.f32 0.0, %v354
        %v356 = vpop.f32.mrf.mxu0
        %357 = vdwg.mxu0
        %v358 = vmul.f32 %v355, 0.35355338
        %v359 = vlaneseq
        %v360 = vshrl.u32 %v359, 7
        %v361 = vstv %s329
        %v362 = vadd.s32 %v361, %v360
        %v363 = vlaneseq
        %v364 = vand.u32 %v363, 127
        %v365 = vstv %s330
        %v366 = vadd.s32 %v365, %v364
        %vm367 = vcmp.le.s32.totalorder %v366, %v362
        %v368 = vsel %vm367, %v358, -1e+30
        %v369 = vld [vmem:[#allocation2] sm:$0xff]
        %v370 = vsel %vm338, %v368, -inf
        %371 = vmax.xlane.f32.xlu0 %v370
        %v372 = vpop.xlane.xlu0 %371
        %v373 = vmax.f32 %v369, %v372
        %v374 = vsub.f32 %v369, %v373
        %v375 = vmul.f32 %v374, 1.442695
        %v376 = vpow.pop %v375
        %378 = vset.pattern.permute.xlu0 0
        %379 = vperm.xlu0 %378, %v373
        %v380 = vpop.permute.xlu0 %379
        %v382 = vsub.f32 %v368, %v380
        %v383 = vmul.f32 %v382, 1.442695
        %v384 = vpow.pop %v383
        %v385 = vld [vmem:[#allocation3] sm:$0xff]
        %v386 = vmul.f32 %v376, %v385
        %v387 = vsel %vm338, %v384, 0.0
        %388 = vadd.xlane.f32.xlu0 %v387
        %v389 = vpop.xlane.xlu0 %388
        %v390 = vadd.f32 %v386, %v389
        %vm391 = vcmask 7168
        %392 = vst.msk [vmem:[#allocation3] sm:$0xff] %vm391, %v390
        %v393 = vld [vmem:[#allocation4] sm:$0xff]
        %395 = vset.pattern.permute.xlu0 0
        %396 = vperm.xlu0 %395, %v376
        %v397 = vpop.permute.xlu0 %396
        %v399 = vmul.f32 %v397, %v393
        %v400 = vpack.c.bf16 %v384, %v384
        %v401 = vld [vmem:[%s307] sm:$0xf]
        %v403 = vsel %vm338, %v400, 0
        %vm405 = vcmask 1043456
        %v407 = vsel %vm405, %v401, 0
        %409 = vmatpush.bf16.msra.mxu0 0
        %410 = vmatpush.bf16.msra.mxu0 0
        %411 = vmatpush.bf16.msra.mxu0 0
        %412 = vmatpush.bf16.msra.mxu0 0
        %413 = vmatpush.bf16.msra.mxu0 0
        %414 = vmatpush.bf16.msra.mxu0 0
        %415 = vmatpush.bf16.msra.mxu0 0
        %416 = vmatpush.bf16.msra.mxu0 %v407
        %417 = vmatmul.bf16.gmra.mxu0 %v403
        %v418 = vpop.f32.mrf.mxu0
        %v419 = vadd.f32 0.0, %v418
        %v420 = vpop.f32.mrf.mxu0
        %421 = vdwg.mxu0
        %v422 = vadd.f32 %v399, %v419
        %423 = vst.msk [vmem:[#allocation4] sm:$0xff] %vm338, %v422
        %424 = vst.msk [vmem:[#allocation2] sm:$0xff] %vm391, %v373
      $region40: #{transformer_block.4} parent=31 // pred_fallthru
        _
      // Predicated region
      $region41: #{transformer_block.4} parent=31 // pred_check
        %p425 = pneg %p320
      $region42: #{transformer_block.4} parent=31 // pred_check_branch
        %427 = sbr.rel (%p425) target = $region44
      $region43: #{transformer_block.4} parent=31 // pred_region
        %v428 = vld [vmem:[#allocation4] sm:$0xff]
        %v429 = vld [vmem:[#allocation3] sm:$0xff]
        %v430 = vrcp.pop %v429
        %432 = vset.pattern.permute.xlu0 0
        %433 = vperm.xlu0 %432, %v430
        %v434 = vpop.permute.xlu0 %433
        %v436 = vmul.f32 %v428, %v434
        %v437 = vpack.c.bf16 %v436, %v436
        %vm438 = vcmask 60416
        %439 = vst.msk [vmem:[%s318] sm:$0xf] %vm438, %v437
      $region44: #{transformer_block.4} parent=31 // pred_fallthru
        _
      %p440 = scmp.lt.s32.totalorder %s20, 1
      %s441 = scalar_select %p440, %s20, 1
      %p442 = scmp.lt.s32.totalorder %s21, 3
      %s443 = scalar_select %p442, %s21, 3
      %p444 = scmp.lt.s32.totalorder %s22, 0
      %s445 = scalar_select %p444, %s22, 0
      %s446 = sadd.s32 %s445, %s443
      %s447 = smul.addr %s441, 4
      %s448 = sadd.s32 %s446, %s447
      %s449 = smul.addr %s448, 4
      %s450 = scalar_lea.vmem %s3, %s449
      // Predicated region
      $region45: #{transformer_block.4} parent=31 // pred_check
        %p451 = pneg %p152
      $region46: #{transformer_block.4} parent=31 // pred_check_branch
        %453 = sbr.rel (%p451) target = $region48
      $region47: #{transformer_block.4} parent=31 // pred_region
        _
      $region48: #{transformer_block.4} parent=31 // pred_fallthru
        _
    $region32: #{transformer_block.4} parent=5 // pred_fallthru
      _
    %p454 = scmp.le.s32.totalorder 2, %s9
    // Predicated region
    $region49: #{transformer_block.4} parent=5 // pred_check
      %p455 = pneg %p454
    $region50: #{transformer_block.4} parent=5 // pred_check_branch
      %457 = sbr.rel (%p455) target = $region52
    $region51: #{transformer_block.4} parent=5 // pred_region
      %s458 = ssub.s32 %s9, 2
      // Predicated region
      $region53: #{transformer_block.4} parent=51 // pred_check
        %p459 = pneg %p158
      $region54: #{transformer_block.4} parent=51 // pred_check_branch
        %461 = sbr.rel (%p459) target = $region56
      $region55: #{transformer_block.4} parent=51 // pred_region
        %p462 = scmp.lt.s32.totalorder %s24, 1
        %s463 = scalar_select %p462, %s24, 1
        %p464 = scmp.lt.s32.totalorder %s25, 3
        %s465 = scalar_select %p464, %s25, 3
        %p466 = scmp.lt.s32.totalorder %s26, 0
        %s467 = scalar_select %p466, %s26, 0
        %s468 = sadd.s32 %s467, %s465
        %s469 = smul.addr %s463, 4
        %s470 = sadd.s32 %s468, %s469
        %s471 = smul.addr %s470, 4
        %s472 = scalar_lea.vmem %s3, %s471
      $region56: #{transformer_block.4} parent=51 // pred_fallthru
        _
    $region52: #{transformer_block.4} parent=5 // pred_fallthru
      _
  $region6: #{transformer_block.4} parent=0 // loop_footer
    %s13 = sadd.s32 1, %s9
  $region7: #{transformer_block.4} parent=0 // loop_footer_branch
    %8 = sbr.rel target = $region3
  $region8: #{transformer_block.4} parent=0 // loop_exit
    _

// kernel: transformer_block.3
$region0: #{transformer_block.3}
  #allocation0 [shape = 'u32[]', space=smem, size = 0x4, offset = 0x4, fixed_abs, tag = 'smem constant byte address 0x4 - core index']
  #allocation1 [shape = 'u32[72,128]{1,0:T(1,128)}', space=vmem, size = 0x9000, scoped, tag = 'internal scratch']
  %s0 = inlined_call_operand.vmem [shape: f32[2,8,32], index: 0, kind: input, shape index: {}]
  %s1 = inlined_call_operand.vmem [shape: f32[1,32], index: 1, kind: input, shape index: {}]
  %s2 = inlined_call_operand.vmem [shape: bf16[32,96], index: 2, kind: input, shape index: {}]
  %s3 = inlined_call_operand.vmem [shape: bf16[2,8,96], index: 3, kind: output, shape index: {}]
  %s4 = sld [smem:[#allocation0]]
  $region45: #{transformer_block.3} parent=0
    _
  %s6 = ssub.s32 1, %s4
  %s7 = scalar_select 0, %s6, %s4
  loop: start=0, step=1, limit=4
  $region2: #{transformer_block.3} parent=0 // loop_pre_header
    _
  $region3: #{transformer_block.3} parent=0 // loop_header
    %s9 = sphi 0, %s13
    %p10 = scmp.ge.s32.totalorder %s9, 4
    %s16 = sphi 0, %s28
    %s17 = sphi 0, %s24
    %s18 = sphi 0, %s16
    %s19 = sphi 0, %s17
    %s20 = sphi 0, %s18
    %s21 = sphi 0, %s19
    %s33 = sphi 0, %s35
    %s36 = sphi 0, %s33
    %s37 = sphi 0, %s36
    %s53 = sphi 0, %s37
    %s57 = sphi 0, %s57
    %s59 = sphi 0, %s57
    %s60 = sphi 0, %s59
    %s74 = sphi 0, %s60
    %s78 = sphi 0, %s78
    %s80 = sphi 0, %s78
    %s81 = sphi 0, %s80
    %s95 = sphi 0, %s81
    %s103 = sphi 0, %s105
    %s106 = sphi 0, %s103
    %s107 = sphi 0, %s106
    %s123 = sphi 0, %s107
  $region4: #{transformer_block.3} parent=0 // loop_header_branch
    %12 = sbr.rel (%p10) target = $region8
  $region5: #{transformer_block.3} parent=0 // loop_body
    %s14 = ssub.s32 %s9, 1
    %s15 = ssub.s32 %s9, 2
    %s22 = sadd.s32 1, %s17
    %p23 = scmp.ge.s32.totalorder %s22, 1
    %s24 = scalar_select %p23, 0, %s22
    %s25 = sadd.s32 1, %s16
    %s26 = scalar_select %p23, %s25, %s16
    %p27 = scmp.ge.s32.totalorder %s26, 2
    %s28 = scalar_select %p27, 0, %s26
    %s29 = ssub.s32 %s16, %s28
    %s30 = ssub.s32 %s17, %s24
    %s31 = sor.u32 %s29, %s30
    %p32 = scmp.eq.s32.totalorder %s31, 0
    %s34 = sadd.s32 %s33, 1
    %s35 = scalar_select %p32, %s33, %s34
    %p38 = pneg %p32
    %p39 = scmp.eq.s32.totalorder %s9, 1
    %p40 = por %p38, %p39
    %p41 = scmp.ne.s32.totalorder %s33, %s36
    %p42 = scmp.eq.s32.totalorder %s9, 0
    %p43 = por %p41, %p42
    %p44 = scmp.ne.s32.totalorder %s33, %s36
    %p45 = scmp.eq.s32.totalorder %s14, 1
    %p46 = por %p44, %p45
    %p47 = scmp.ne.s32.totalorder %s36, %s37
    %p48 = scmp.eq.s32.totalorder %s14, 0
    %p49 = por %p47, %p48
    %p50 = scmp.ne.s32.totalorder %s36, %s37
    %p51 = scmp.eq.s32.totalorder %s15, 1
    %p52 = por %p50, %p51
    %p54 = scmp.ne.s32.totalorder %s37, %s53
    %p55 = scmp.eq.s32.totalorder %s15, 0
    %p56 = por %p54, %p55
    %s58 = sadd.s32 %s57, 1
    %p61 = scmp.eq.s32.totalorder %s9, 1
    %p62 = scmp.ne.s32.totalorder %s57, %s59
    %p63 = scmp.eq.s32.totalorder %s9, 0
    %p64 = por %p62, %p63
    %p65 = scmp.ne.s32.totalorder %s57, %s59
    %p66 = scmp.eq.s32.totalorder %s14, 1
    %p67 = por %p65, %p66
    %p68 = scmp.ne.s32.totalorder %s59, %s60
    %p69 = scmp.eq.s32.totalorder %s14, 0
    %p70 = por %p68, %p69
    %p71 = scmp.ne.s32.totalorder %s59, %s60
    %p72 = scmp.eq.s32.totalorder %s15, 1
    %p73 = por %p71, %p72
    %p75 = scmp.ne.s32.totalorder %s60, %s74
    %p76 = scmp.eq.s32.totalorder %s15, 0
    %p77 = por %p75, %p76
    %s79 = sadd.s32 %s78, 1
    %p82 = scmp.eq.s32.totalorder %s9, 1
    %p83 = scmp.ne.s32.totalorder %s78, %s80
    %p84 = scmp.eq.s32.totalorder %s9, 0
    %p85 = por %p83, %p84
    %p86 = scmp.ne.s32.totalorder %s78, %s80
    %p87 = scmp.eq.s32.totalorder %s14, 1
    %p88 = por %p86, %p87
    %p89 = scmp.ne.s32.totalorder %s80, %s81
    %p90 = scmp.eq.s32.totalorder %s14, 0
    %p91 = por %p89, %p90
    %p92 = scmp.ne.s32.totalorder %s80, %s81
    %p93 = scmp.eq.s32.totalorder %s15, 1
    %p94 = por %p92, %p93
    %p96 = scmp.ne.s32.totalorder %s81, %s95
    %p97 = scmp.eq.s32.totalorder %s15, 0
    %p98 = por %p96, %p97
    %s99 = ssub.s32 %s16, %s28
    %s100 = ssub.s32 %s17, %s24
    %s101 = sor.u32 %s99, %s100
    %p102 = scmp.eq.s32.totalorder %s101, 0
    %s104 = sadd.s32 %s103, 1
    %s105 = scalar_select %p102, %s103, %s104
    %p108 = pneg %p102
    %p109 = scmp.eq.s32.totalorder %s9, 1
    %p110 = por %p108, %p109
    %p111 = scmp.ne.s32.totalorder %s103, %s106
    %p112 = scmp.eq.s32.totalorder %s9, 0
    %p113 = por %p111, %p112
    %p114 = scmp.ne.s32.totalorder %s103, %s106
    %p115 = scmp.eq.s32.totalorder %s14, 1
    %p116 = por %p114, %p115
    %p117 = scmp.ne.s32.totalorder %s106, %s107
    %p118 = scmp.eq.s32.totalorder %s14, 0
    %p119 = por %p117, %p118
    %p120 = scmp.ne.s32.totalorder %s106, %s107
    %p121 = scmp.eq.s32.totalorder %s15, 1
    %p122 = por %p120, %p121
    %p124 = scmp.ne.s32.totalorder %s107, %s123
    %p125 = scmp.eq.s32.totalorder %s15, 0
    %p126 = por %p124, %p125
    %p127 = scmp.le.s32.totalorder 1, %s9
    %p128 = scmp.lt.s32.totalorder %s9, 3
    %p129 = pnand %p127, %p128
    %p130 = pneg %p129
    // Predicated region
    $region9: #{transformer_block.3} parent=5 // pred_check
      _
    $region10: #{transformer_block.3} parent=5 // pred_check_branch
      %132 = sbr.rel (%p129) target = $region12
    $region11: #{transformer_block.3} parent=5 // pred_region
      %s133 = ssub.s32 %s9, 1
      // Predicated region
      $region13: #{transformer_block.3} parent=11 // pred_check
        %p134 = pneg %p70
      $region14: #{transformer_block.3} parent=11 // pred_check_branch
        %136 = sbr.rel (%p134) target = $region16
      $region15: #{transformer_block.3} parent=11 // pred_region
        _
      $region16: #{transformer_block.3} parent=11 // pred_fallthru
        _
      // Predicated region
      $region17: #{transformer_block.3} parent=11 // pred_check
        %p137 = pneg %p91
      $region18: #{transformer_block.3} parent=11 // pred_check_branch
        %139 = sbr.rel (%p137) target = $region20
      $region19: #{transformer_block.3} parent=11 // pred_region
        _
      $region20: #{transformer_block.3} parent=11 // pred_fallthru
        _
    $region12: #{transformer_block.3} parent=5 // pred_fallthru
      _
    %p140 = scmp.lt.s32.totalorder %s9, 2
    // Predicated region
    $region21: #{transformer_block.3} parent=5 // pred_check
      %p141 = pneg %p140
    $region22: #{transformer_block.3} parent=5 // pred_check_branch
      %143 = sbr.rel (%p141) target = $region24
    $region23: #{transformer_block.3} parent=5 // pred_region
      // Predicated region
      $region25: #{transformer_block.3} parent=23 // pred_check
        %p144 = pneg %p43
      $region26: #{transformer_block.3} parent=23 // pred_check_branch
        %146 = sbr.rel (%p144) target = $region28
      $region27: #{transformer_block.3} parent=23 // pred_region
        %p147 = scmp.lt.s32.totalorder %s16, 1
        %s148 = scalar_select %p147, %s16, 1
        %p149 = scmp.lt.s32.totalorder %s17, 0
        %s150 = scalar_select %p149, %s17, 0
        %s151 = sadd.s32 %s150, %s148
        %s152 = smul.addr %s151, 8
        %s153 = scalar_lea.vmem %s0, %s152
      $region28: #{transformer_block.3} parent=23 // pred_fallthru
        _
    $region24: #{transformer_block.3} parent=5 // pred_fallthru
      _
    %p154 = scmp.le.s32.totalorder 1, %s9
    %p155 = scmp.lt.s32.totalorder %s9, 3
    %p156 = pnand %p154, %p155
    %p157 = pneg %p156
    // Predicated region
    $region29: #{transformer_block.3} parent=5 // pred_check
      _
    $region30: #{transformer_block.3} parent=5 // pred_check_branch
      %159 = sbr.rel (%p156) target = $region32
    $region31: #{transformer_block.3} parent=5 // pred_region
      %s160 = ssub.s32 %s9, 1
      %p161 = scmp.lt.s32.totalorder %s18, 1
      %s162 = scalar_select %p161, %s18, 1
      %p163 = scmp.lt.s32.totalorder %s19, 0
      %s164 = scalar_select %p163, %s19, 0
      %s165 = sadd.s32 %s164, %s162
      %s166 = smul.addr %s165, 8
      %s167 = scalar_lea.vmem %s0, %s166
      %p168 = pneg %p49
      %p169 = pneg %p46
      %p170 = pneg %p70
      %p171 = pneg %p67
      %p172 = pneg %p91
      %p173 = pneg %p88
      %p174 = pneg %p119
      %p175 = pneg %p116
      %p176 = scmp.lt.s32.totalorder %s18, 1
      %s177 = scalar_select %p176, %s18, 1
      %p178 = scmp.lt.s32.totalorder %s19, 0
      %s179 = scalar_select %p178, %s19, 0
      %s180 = sadd.s32 %s179, %s177
      %s181 = smul.addr %s180, 4
      %s182 = scalar_lea.vmem %s3, %s181
      %p183 = scmp.lt.s32.totalorder %s18, 1
      %s184 = scalar_select %p183, %s18, 1
      %p185 = scmp.lt.s32.totalorder %s19, 0
      %s186 = scalar_select %p185, %s19, 0
      %s187 = sadd.s32 %s186, %s184
      %s188 = smul.addr %s187, 8
      %s189 = scalar_lea.vmem %s0, %s188
      %p190 = scmp.lt.s32.totalorder %s18, 1
      %s191 = scalar_select %p190, %s18, 1
      %p192 = scmp.lt.s32.totalorder %s19, 0
      %s193 = scalar_select %p192, %s19, 0
      %s194 = sadd.s32 %s193, %s191
      %s195 = smul.addr %s194, 4
      %s196 = scalar_lea.vmem %s3, %s195
      %v198 = vld [vmem:[%s189] sm:$0xff]
      %v199 = vld [vmem:[%s1] sm:$0x1]
      %vm200 = vcmask 261120
      %v201 = vsel %vm200, %v198, 0.0
      %202 = vadd.xlane.f32.xlu0 %v201
      %v203 = vpop.xlane.xlu0 %202
      %v204 = vrcp.pop 32.0
      %v205 = vmul.f32 32.0, %v204
      %v206 = vsub.f32 1.0, %v205
      %v207 = vmul.f32 %v204, %v206
      %v208 = vadd.f32 %v204, %v207
      %vm209 = vweird.f32 %v204
      %v210 = vsel %vm209, %v204, %v208
      %v211 = vmul.f32 %v203, %v210
      %v212 = vsub.f32 %v198, %v211
      %v213 = vmul.f32 %v212, %v212
      %v214 = vsel %vm200, %v213, 0.0
      %215 = vadd.xlane.f32.xlu0 %v214
      %v216 = vpop.xlane.xlu0 %215
      %v217 = vmul.f32 %v216, %v210
      %v218 = vadd.f32 %v217, 1e-05
      %v219 = vrsqrt.pop %v218
      %v220 = vmul.f32 %v219, %v218
      %v221 = vmul.f32 %v220, %v219
      %v222 = vmul.f32 0.5, %v221
      %v223 = vsub.f32 1.5, %v222
      %v224 = vmul.f32 %v219, %v223
      %vm225 = vweird.f32 %v218
      %vm226 = vweird.f32 %v219
      %vm227 = vmor %vm225, %vm226
      %v228 = vsel %vm227, %v219, %v224
      %v229 = vmul.f32 %v212, %v228
      %v231 = vperm.slane %v199, 0
      %v233 = vmul.f32 %v229, %v231
      %v234 = vpack.c.bf16 %v233, %v233
      %v235 = vld [vmem:[%s2] sm:$0xf]
      %v236 = vld [vmem:[%s2 + $0x4] sm:$0xf]
      %v237 = vld [vmem:[%s2 + $0x8] sm:$0xf]
      %v238 = vld [vmem:[%s2 + $0xc] sm:$0xf]
      %v243 = vunpack.c.l.b16 %v235
      %v244 = vunpack.c.l.b16 %v236
      %v245 = vunpack.c.l.b16 %v237
      %v246 = vunpack.c.l.b16 %v238
      %v247 = vpack.c.b16 %v244, %v243
      %v248 = vpack.c.b16 %v246, %v245
      %v252 = vsel %vm200, %v234, 0
      %254 = vmatpush.bf16.msra.mxu0 0
      %255 = vmatpush.bf16.msra.mxu0 0
      %256 = vmatpush.bf16.msra.mxu0 0
      %257 = vmatpush.bf16.msra.mxu0 0
      %258 = vmatpush.bf16.msra.mxu0 0
      %259 = vmatpush.bf16.msra.mxu0 0
      %260 = vmatpush.bf16.msra.mxu0 %v248
      %261 = vmatpush.bf16.msra.mxu0 %v247
      %262 = vmatmul.bf16.gmra.mxu0 %v252
      %v263 = vpop.f32.mrf.mxu0
      %v264 = vadd.f32 0.0, %v263
      %v265 = vpop.f32.mrf.mxu0
      %266 = vdwg.mxu0
      %v267 = vpack.c.bf16 %v264, %v264
      %vm268 = vcmask 781312
      %269 = vst.msk [vmem:[%s196] sm:$0xf] %vm268, %v267
      %p270 = scmp.lt.s32.totalorder %s18, 1
      %s271 = scalar_select %p270, %s18, 1
      %p272 = scmp.lt.s32.totalorder %s19, 0
      %s273 = scalar_select %p272, %s19, 0
      %s274 = sadd.s32 %s273, %s271
      %s275 = smul.addr %s274, 4
      %s276 = scalar_lea.vmem %s3, %s275
      // Predicated region
      $region33: #{transformer_block.3} parent=31 // pred_check
        %p277 = pneg %p116
      $region34: #{transformer_block.3} parent=31 // pred_check_branch
        %279 = sbr.rel (%p277) target = $region36
      $region35: #{transformer_block.3} parent=31 // pred_region
        _
      $region36: #{transformer_block.3} parent=31 // pred_fallthru
        _
    $region32: #{transformer_block.3} parent=5 // pred_fallthru
      _
    %p280 = scmp.le.s32.totalorder 2, %s9
    // Predicated region
    $region37: #{transformer_block.3} parent=5 // pred_check
      %p281 = pneg %p280
    $region38: #{transformer_block.3} parent=5 // pred_check_branch
      %283 = sbr.rel (%p281) target = $region40
    $region39: #{transformer_block.3} parent=5 // pred_region
      %s284 = ssub.s32 %s9, 2
      // Predicated region
      $region41: #{transformer_block.3} parent=39 // pred_check
        %p285 = pneg %p122
      $region42: #{transformer_block.3} parent=39 // pred_check_branch
        %287 = sbr.rel (%p285) target = $region44
      $region43: #{transformer_block.3} parent=39 // pred_region
        %p288 = scmp.lt.s32.totalorder %s20, 1
        %s289 = scalar_select %p288, %s20, 1
        %p290 = scmp.lt.s32.totalorder %s21, 0
        %s291 = scalar_select %p290, %s21, 0
        %s292 = sadd.s32 %s291, %s289
        %s293 = smul.addr %s292, 4
        %s294 = scalar_lea.vmem %s3, %s293
      $region44: #{transformer_block.3} parent=39 // pred_fallthru
        _
    $region40: #{transformer_block.3} parent=5 // pred_fallthru
      _
  $region6: #{transformer_block.3} parent=0 // loop_footer
    %s13 = sadd.s32 1, %s9
  $region7: #{transformer_block.3} parent=0 // loop_footer_branch
    %8 = sbr.rel target = $region3
  $region8: #{transformer_block.3} parent=0 // loop_exit
    _

// kernel: transformer_block.5
$region0: #{transformer_block.5}
  #allocation0 [shape = 'u32[]', space=smem, size = 0x4, offset = 0x4, fixed_abs, tag = 'smem constant byte address 0x4 - core index']
  #allocation1 [shape = 'u32[72,128]{1,0:T(1,128)}', space=vmem, size = 0x9000, scoped, tag = 'internal scratch']
  #allocation2 [shape = 'f32[8,32]{1,0:T(8,128)}', space=vmem, size = 0x1000, scoped, tag = 'scratch operand']
  #allocation3 [shape = 'bf16[8,32]{1,0:T(8,128)(2,1)}', space=vmem, size = 0x800, scoped, tag = 'scratch operand']
  #allocation4 [shape = 'f32[8,32]{1,0:T(8,128)}', space=vmem, size = 0x1000, scoped, tag = 'scratch operand']
  %s0 = inlined_call_operand.vmem [shape: f32[2,8,32], index: 0, kind: input, shape index: {}]
  %s1 = inlined_call_operand.vmem [shape: bf16[2,8,32], index: 1, kind: input, shape index: {}]
  %s2 = inlined_call_operand.vmem [shape: bf16[32,32], index: 2, kind: input, shape index: {}]
  %s3 = inlined_call_operand.vmem [shape: f32[1,32], index: 3, kind: input, shape index: {}]
  %s4 = inlined_call_operand.vmem [shape: bf16[32,128], index: 4, kind: input, shape index: {}]
  %s5 = inlined_call_operand.vmem [shape: bf16[128,32], index: 5, kind: input, shape index: {}]
  %s6 = inlined_call_operand.hbm [shape: f32[2,8,32], index: 6, kind: output, shape index: {}]
  %s7 = sld [smem:[#allocation0]]
  $region65: #{transformer_block.5} parent=0
    _
  %s9 = ssub.s32 1, %s7
  %s10 = scalar_select 0, %s9, %s7
  $region1: #{transformer_block.5} parent=0
    #allocation5 [shape = 'u8[8192]{0}', space=vmem, size = 0x2000, scoped, tag = 'output window, operand 0']
    #allocation6 [shape = 's32[2]{0}', space=sflag, size = 0x8, scoped, tag = 'scoped memory for transformer_block.5']
    %11 = vsyncpa [#allocation6], 0
    %s12 = scalar_lea.sflag [#allocation6], 1
    %13 = vsyncpa %s12, 0
    loop: start=0, step=1, limit=4
    $region2: #{transformer_block.5} parent=1 // loop_pre_header
      _
    $region3: #{transformer_block.5} parent=1 // loop_header
      %s15 = sphi 0, %s19
      %p16 = scmp.ge.s32.totalorder %s15, 4
      %s22 = sphi 0, %s41
      %s23 = sphi 0, %s37
      %s24 = sphi 0, %s33
      %s25 = sphi 0, %s22
      %s26 = sphi 0, %s23
      %s27 = sphi 0, %s24
      %s28 = sphi 0, %s25
      %s29 = sphi 0, %s26
      %s30 = sphi 0, %s27
      %s46 = sphi 0, %s48
      %s49 = sphi 0, %s46
      %s50 = sphi 0, %s49
      %s66 = sphi 0, %s50
      %s74 = sphi 0, %s76
      %s77 = sphi 0, %s74
      %s78 = sphi 0, %s77
      %s94 = sphi 0, %s78
      %s98 = sphi 0, %s98
      %s100 = sphi 0, %s98
      %s101 = sphi 0, %s100
      %s115 = sphi 0, %s101
      %s119 = sphi 0, %s119
      %s121 = sphi 0, %s119
      %s122 = sphi 0, %s121
      %s136 = sphi 0, %s122
      %s142 = sphi 0, %s144
      %s145 = sphi 0, %s142
      %s146 = sphi 0, %s145
      %s162 = sphi 0, %s146
      %s168 = sphi 0, %s170
      %s171 = sphi 0, %s168
      %s172 = sphi 0, %s171
      %s188 = sphi 0, %s172
      %s196 = sphi 0, %s198
      %s199 = sphi 0, %s196
      %s200 = sphi 0, %s199
      %s216 = sphi 0, %s200
    $region4: #{transformer_block.5} parent=1 // loop_header_branch
      %18 = sbr.rel (%p16) target = $region8
    $region5: #{transformer_block.5} parent=1 // loop_body
      %s20 = ssub.s32 %s15, 1
      %s21 = ssub.s32 %s15, 2
      %s31 = sadd.s32 1, %s24
      %p32 = scmp.ge.s32.totalorder %s31, 1
      %s33 = scalar_select %p32, 0, %s31
      %s34 = sadd.s32 1, %s23
      %s35 = scalar_select %p32, %s34, %s23
      %p36 = scmp.ge.s32.totalorder %s35, 1
      %s37 = scalar_select %p36, 0, %s35
      %s38 = sadd.s32 1, %s22
      %s39 = scalar_select %p36, %s38, %s22
      %p40 = scmp.ge.s32.totalorder %s39, 2
      %s41 = scalar_select %p40, 0, %s39
      %s42 = ssub.s32 %s22, %s41
      %s43 = ssub.s32 %s23, %s37
      %s44 = sor.u32 %s42, %s43
      %p45 = scmp.eq.s32.totalorder %s44, 0
      %s47 = sadd.s32 %s46, 1
      %s48 = scalar_select %p45, %s46, %s47
      %p51 = pneg %p45
      %p52 = scmp.eq.s32.totalorder %s15, 1
      %p53 = por %p51, %p52
      %p54 = scmp.ne.s32.totalorder %s46, %s49
      %p55 = scmp.eq.s32.totalorder %s15, 0
      %p56 = por %p54, %p55
      %p57 = scmp.ne.s32.totalorder %s46, %s49
      %p58 = scmp.eq.s32.totalorder %s20, 1
      %p59 = por %p57, %p58
      %p60 = scmp.ne.s32.totalorder %s49, %s50
      %p61 = scmp.eq.s32.totalorder %s20, 0
      %p62 = por %p60, %p61
      %p63 = scmp.ne.s32.totalorder %s49, %s50
      %p64 = scmp.eq.s32.totalorder %s21, 1
      %p65 = por %p63, %p64
      %p67 = scmp.ne.s32.totalorder %s50, %s66
      %p68 = scmp.eq.s32.totalorder %s21, 0
      %p69 = por %p67, %p68
      %s70 = ssub.s32 %s22, %s41
      %s71 = ssub.s32 %s23, %s37
      %s72 = sor.u32 %s70, %s71
      %p73 = scmp.eq.s32.totalorder %s72, 0
      %s75 = sadd.s32 %s74, 1
      %s76 = scalar_select %p73, %s74, %s75
      %p79 = pneg %p73
      %p80 = scmp.eq.s32.totalorder %s15, 1
      %p81 = por %p79, %p80
      %p82 = scmp.ne.s32.totalorder %s74, %s77
      %p83 = scmp.eq.s32.totalorder %s15, 0
      %p84 = por %p82, %p83
      %p85 = scmp.ne.s32.totalorder %s74, %s77
      %p86 = scmp.eq.s32.totalorder %s20, 1
      %p87 = por %p85, %p86
      %p88 = scmp.ne.s32.totalorder %s77, %s78
      %p89 = scmp.eq.s32.totalorder %s20, 0
      %p90 = por %p88, %p89
      %p91 = scmp.ne.s32.totalorder %s77, %s78
      %p92 = scmp.eq.s32.totalorder %s21, 1
      %p93 = por %p91, %p92
      %p95 = scmp.ne.s32.totalorder %s78, %s94
      %p96 = scmp.eq.s32.totalorder %s21, 0
      %p97 = por %p95, %p96
      %s99 = sadd.s32 %s98, 1
      %p102 = scmp.eq.s32.totalorder %s15, 1
      %p103 = scmp.ne.s32.totalorder %s98, %s100
      %p104 = scmp.eq.s32.totalorder %s15, 0
      %p105 = por %p103, %p104
      %p106 = scmp.ne.s32.totalorder %s98, %s100
      %p107 = scmp.eq.s32.totalorder %s20, 1
      %p108 = por %p106, %p107
      %p109 = scmp.ne.s32.totalorder %s100, %s101
      %p110 = scmp.eq.s32.totalorder %s20, 0
      %p111 = por %p109, %p110
      %p112 = scmp.ne.s32.totalorder %s100, %s101
      %p113 = scmp.eq.s32.totalorder %s21, 1
      %p114 = por %p112, %p113
      %p116 = scmp.ne.s32.totalorder %s101, %s115
      %p117 = scmp.eq.s32.totalorder %s21, 0
      %p118 = por %p116, %p117
      %s120 = sadd.s32 %s119, 1
      %p123 = scmp.eq.s32.totalorder %s15, 1
      %p124 = scmp.ne.s32.totalorder %s119, %s121
      %p125 = scmp.eq.s32.totalorder %s15, 0
      %p126 = por %p124, %p125
      %p127 = scmp.ne.s32.totalorder %s119, %s121
      %p128 = scmp.eq.s32.totalorder %s20, 1
      %p129 = por %p127, %p128
      %p130 = scmp.ne.s32.totalorder %s121, %s122
      %p131 = scmp.eq.s32.totalorder %s20, 0
      %p132 = por %p130, %p131
      %p133 = scmp.ne.s32.totalorder %s121, %s122
      %p134 = scmp.eq.s32.totalorder %s21, 1
      %p135 = por %p133, %p134
      %p137 = scmp.ne.s32.totalorder %s122, %s136
      %p138 = scmp.eq.s32.totalorder %s21, 0
      %p139 = por %p137, %p138
      %s140 = ssub.s32 %s24, %s33
      %p141 = scmp.eq.s32.totalorder %s140, 0
      %s143 = sadd.s32 %s142, 1
      %s144 = scalar_select %p141, %s142, %s143
      %p147 = pneg %p141
      %p148 = scmp.eq.s32.totalorder %s15, 1
      %p149 = por %p147, %p148
      %p150 = scmp.ne.s32.totalorder %s142, %s145
      %p151 = scmp.eq.s32.totalorder %s15, 0
      %p152 = por %p150, %p151
      %p153 = scmp.ne.s32.totalorder %s142, %s145
      %p154 = scmp.eq.s32.totalorder %s20, 1
      %p155 = por %p153, %p154
      %p156 = scmp.ne.s32.totalorder %s145, %s146
      %p157 = scmp.eq.s32.totalorder %s20, 0
      %p158 = por %p156, %p157
      %p159 = scmp.ne.s32.totalorder %s145, %s146
      %p160 = scmp.eq.s32.totalorder %s21, 1
      %p161 = por %p159, %p160
      %p163 = scmp.ne.s32.totalorder %s146, %s162
      %p164 = scmp.eq.s32.totalorder %s21, 0
      %p165 = por %p163, %p164
      %s166 = ssub.s32 %s24, %s33
      %p167 = scmp.eq.s32.totalorder %s166, 0
      %s169 = sadd.s32 %s168, 1
      %s170 = scalar_select %p167, %s168, %s169
      %p173 = pneg %p167
      %p174 = scmp.eq.s32.totalorder %s15, 1
      %p175 = por %p173, %p174
      %p176 = scmp.ne.s32.totalorder %s168, %s171
      %p177 = scmp.eq.s32.totalorder %s15, 0
      %p178 = por %p176, %p177
      %p179 = scmp.ne.s32.totalorder %s168, %s171
      %p180 = scmp.eq.s32.totalorder %s20, 1
      %p181 = por %p179, %p180
      %p182 = scmp.ne.s32.totalorder %s171, %s172
      %p183 = scmp.eq.s32.totalorder %s20, 0
      %p184 = por %p182, %p183
      %p185 = scmp.ne.s32.totalorder %s171, %s172
      %p186 = scmp.eq.s32.totalorder %s21, 1
      %p187 = por %p185, %p186
      %p189 = scmp.ne.s32.totalorder %s172, %s188
      %p190 = scmp.eq.s32.totalorder %s21, 0
      %p191 = por %p189, %p190
      %s192 = ssub.s32 %s22, %s41
      %s193 = ssub.s32 %s23, %s37
      %s194 = sor.u32 %s192, %s193
      %p195 = scmp.eq.s32.totalorder %s194, 0
      %s197 = sadd.s32 %s196, 1
      %s198 = scalar_select %p195, %s196, %s197
      %p201 = pneg %p195
      %p202 = scmp.eq.s32.totalorder %s15, 1
      %p203 = por %p201, %p202
      %p204 = scmp.ne.s32.totalorder %s196, %s199
      %p205 = scmp.eq.s32.totalorder %s15, 0
      %p206 = por %p204, %p205
      %p207 = scmp.ne.s32.totalorder %s196, %s199
      %p208 = scmp.eq.s32.totalorder %s20, 1
      %p209 = por %p207, %p208
      %p210 = scmp.ne.s32.totalorder %s199, %s200
      %p211 = scmp.eq.s32.totalorder %s20, 0
      %p212 = por %p210, %p211
      %p213 = scmp.ne.s32.totalorder %s199, %s200
      %p214 = scmp.eq.s32.totalorder %s21, 1
      %p215 = por %p213, %p214
      %p217 = scmp.ne.s32.totalorder %s200, %s216
      %p218 = scmp.eq.s32.totalorder %s21, 0
      %p219 = por %p217, %p218
      %p220 = scmp.le.s32.totalorder 1, %s15
      %p221 = scmp.lt.s32.totalorder %s15, 3
      %p222 = pnand %p220, %p221
      %p223 = pneg %p222
      // Predicated region
      $region9: #{transformer_block.5} parent=5 // pred_check
        _
      $region10: #{transformer_block.5} parent=5 // pred_check_branch
        %225 = sbr.rel (%p222) target = $region12
      $region11: #{transformer_block.5} parent=5 // pred_region
        %s226 = ssub.s32 %s15, 1
        // Predicated region
        $region13: #{transformer_block.5} parent=11 // pred_check
          %p227 = pneg %p111
        $region14: #{transformer_block.5} parent=11 // pred_check_branch
          %229 = sbr.rel (%p227) target = $region16
        $region15: #{transformer_block.5} parent=11 // pred_region
          _
        $region16: #{transformer_block.5} parent=11 // pred_fallthru
          _
        // Predicated region
        $region17: #{transformer_block.5} parent=11 // pred_check
          %p230 = pneg %p132
        $region18: #{transformer_block.5} parent=11 // pred_check_branch
          %232 = sbr.rel (%p230) target = $region20
        $region19: #{transformer_block.5} parent=11 // pred_region
          _
        $region20: #{transformer_block.5} parent=11 // pred_fallthru
          _
        // Predicated region
        $region21: #{transformer_block.5} parent=11 // pred_check
          %p233 = pneg %p158
        $region22: #{transformer_block.5} parent=11 // pred_check_branch
          %235 = sbr.rel (%p233) target = $region24
        $region23: #{transformer_block.5} parent=11 // pred_region
          %p236 = scmp.lt.s32.totalorder %s27, 0
          %s237 = scalar_select %p236, %s27, 0
          %s238 = smul.addr %s237, 4
          %s239 = scalar_lea.vmem %s4, %s238
        $region24: #{transformer_block.5} parent=11 // pred_fallthru
          _
        // Predicated region
        $region25: #{transformer_block.5} parent=11 // pred_check
          %p240 = pneg %p184
        $region26: #{transformer_block.5} parent=11 // pred_check_branch
          %242 = sbr.rel (%p240) target = $region28
        $region27: #{transformer_block.5} parent=11 // pred_region
          %s243 = smul.u32 16, %s27
          %p244 = scmp.lt.s32.totalorder %s243, 15
          %s245 = scalar_select %p244, %s243, 15
          %s246 = smul.addr %s245, 4
          %s247 = scalar_lea.vmem %s5, %s246
          %s248 = smul.u32 16, %s27
        $region28: #{transformer_block.5} parent=11 // pred_fallthru
          _
      $region12: #{transformer_block.5} parent=5 // pred_fallthru
        _
      %p249 = scmp.lt.s32.totalorder %s15, 2
      // Predicated region
      $region29: #{transformer_block.5} parent=5 // pred_check
        %p250 = pneg %p249
      $region30: #{transformer_block.5} parent=5 // pred_check_branch
        %252 = sbr.rel (%p250) target = $region32
      $region31: #{transformer_block.5} parent=5 // pred_region
        // Predicated region
        $region33: #{transformer_block.5} parent=31 // pred_check
          %p253 = pneg %p56
        $region34: #{transformer_block.5} parent=31 // pred_check_branch
          %255 = sbr.rel (%p253) target = $region36
        $region35: #{transformer_block.5} parent=31 // pred_region
          %p256 = scmp.lt.s32.totalorder %s22, 1
          %s257 = scalar_select %p256, %s22, 1
          %p258 = scmp.lt.s32.totalorder %s23, 0
          %s259 = scalar_select %p258, %s23, 0
          %s260 = sadd.s32 %s259, %s257
          %s261 = smul.addr %s260, 8
          %s262 = scalar_lea.vmem %s0, %s261
        $region36: #{transformer_block.5} parent=31 // pred_fallthru
          _
        // Predicated region
        $region37: #{transformer_block.5} parent=31 // pred_check
          %p263 = pneg %p84
        $region38: #{transformer_block.5} parent=31 // pred_check_branch
          %265 = sbr.rel (%p263) target = $region40
        $region39: #{transformer_block.5} parent=31 // pred_region
          %p266 = scmp.lt.s32.totalorder %s22, 1
          %s267 = scalar_select %p266, %s22, 1
          %p268 = scmp.lt.s32.totalorder %s23, 0
          %s269 = scalar_select %p268, %s23, 0
          %s270 = sadd.s32 %s269, %s267
          %s271 = smul.addr %s270, 4
          %s272 = scalar_lea.vmem %s1, %s271
        $region40: #{transformer_block.5} parent=31 // pred_fallthru
          _
      $region32: #{transformer_block.5} parent=5 // pred_fallthru
        _
      %p273 = scmp.le.s32.totalorder 1, %s15
      %p274 = scmp.lt.s32.totalorder %s15, 3
      %p275 = pnand %p273, %p274
      %p276 = pneg %p275
      // Predicated region
      $region41: #{transformer_block.5} parent=5 // pred_check
        _
      $region42: #{transformer_block.5} parent=5 // pred_check_branch
        %278 = sbr.rel (%p275) target = $region44
      $region43: #{transformer_block.5} parent=5 // pred_region
        %s279 = ssub.s32 %s15, 1
        %p280 = scmp.lt.s32.totalorder %s25, 1
        %s281 = scalar_select %p280, %s25, 1
        %p282 = scmp.lt.s32.totalorder %s26, 0
        %s283 = scalar_select %p282, %s26, 0
        %s284 = sadd.s32 %s283, %s281
        %s285 = smul.addr %s284, 8
        %s286 = scalar_lea.vmem %s0, %s285
        %p287 = pneg %p62
        %p288 = pneg %p59
        %p289 = scmp.lt.s32.totalorder %s25, 1
        %s290 = scalar_select %p289, %s25, 1
        %p291 = scmp.lt.s32.totalorder %s26, 0
        %s292 = scalar_select %p291, %s26, 0
        %s293 = sadd.s32 %s292, %s290
        %s294 = smul.addr %s293, 4
        %s295 = scalar_lea.vmem %s1, %s294
        %p296 = pneg %p90
        %p297 = pneg %p87
        %p298 = pneg %p111
        %p299 = pneg %p108
        %p300 = pneg %p132
        %p301 = pneg %p129
        %p302 = scmp.lt.s32.totalorder %s27, 0
        %s303 = scalar_select %p302, %s27, 0
        %s304 = smul.addr %s303, 4
        %s305 = scalar_lea.vmem %s4, %s304
        %p306 = pneg %p158
        %p307 = pneg %p155
        %s308 = smul.u32 16, %s27
        %p309 = scmp.lt.s32.totalorder %s308, 15
        %s310 = scalar_select %p309, %s308, 15
        %s311 = smul.addr %s310, 4
        %s312 = scalar_lea.vmem %s5, %s311
        %p313 = pneg %p184
        %p314 = pneg %p181
        %p315 = pneg %p212
        %p316 = pneg %p209
        %s317 = sand.u32 %s199, 1
        %s318 = scalar_lea.sflag [#allocation6], %s317
        %s319 = sand.u32 %s199, 1
        %s320 = smul.addr %s319, 8
        %s321 = scalar_lea.vmem [#allocation5], %s320
        %p322 = scmp.lt.s32.totalorder %s25, 1
        %s323 = scalar_select %p322, %s25, 1
        %p324 = scmp.lt.s32.totalorder %s26, 0
        %s325 = scalar_select %p324, %s26, 0
        %s326 = sadd.s32 %s325, %s323
        %s327 = smul.addr %s326, 8
        %s328 = scalar_lea.vmem %s0, %s327
        %p329 = scmp.lt.s32.totalorder %s25, 1
        %s330 = scalar_select %p329, %s25, 1
        %p331 = scmp.lt.s32.totalorder %s26, 0
        %s332 = scalar_select %p331, %s26, 0
        %s333 = sadd.s32 %s332, %s330
        %s334 = smul.addr %s333, 4
        %s335 = scalar_lea.vmem %s1, %s334
        %p336 = scmp.lt.s32.totalorder %s27, 0
        %s337 = scalar_select %p336, %s27, 0
        %s338 = smul.addr %s337, 4
        %s339 = scalar_lea.vmem %s4, %s338
        %s340 = smul.u32 16, %s27
        %p341 = scmp.lt.s32.totalorder %s340, 15
        %s342 = scalar_select %p341, %s340, 15
        %s343 = smul.addr %s342, 4
        %s344 = scalar_lea.vmem %s5, %s343
        %s345 = smul.u32 16, %s27
        %p347 = scmp.eq.s32.totalorder %s27, 0
        // Predicated region
        $region45: #{transformer_block.5} parent=43 // pred_check
          %p348 = pneg %p347
        $region46: #{transformer_block.5} parent=43 // pred_check_branch
          %350 = sbr.rel (%p348) target = $region48
        $region47: #{transformer_block.5} parent=43 // pred_region
          %v351 = vld [vmem:[%s335] sm:$0xf]
          %v352 = vld [vmem:[%s2] sm:$0xf]
          %v353 = vld [vmem:[%s2 + $0x4] sm:$0xf]
          %v354 = vld [vmem:[%s2 + $0x8] sm:$0xf]
          %v355 = vld [vmem:[%s2 + $0xc] sm:$0xf]
          %v360 = vunpack.c.l.b16 %v352
          %v361 = vunpack.c.l.b16 %v353
          %v362 = vunpack.c.l.b16 %v354
          %v363 = vunpack.c.l.b16 %v355
          %v364 = vpack.c.b16 %v361, %v360
          %v365 = vpack.c.b16 %v363, %v362
          %vm368 = vcmask 261120
          %v370 = vsel %vm368, %v351, 0
          %372 = vmatpush.bf16.msra.mxu0 0
          %373 = vmatpush.bf16.msra.mxu0 0
          %374 = vmatpush.bf16.msra.mxu0 0
          %375 = vmatpush.bf16.msra.mxu0 0
          %376 = vmatpush.bf16.msra.mxu0 0
          %377 = vmatpush.bf16.msra.mxu0 0
          %378 = vmatpush.bf16.msra.mxu0 %v365
          %379 = vmatpush.bf16.msra.mxu0 %v364
          %380 = vmatmul.bf16.gmra.mxu0 %v370
          %v381 = vpop.f32.mrf.mxu0
          %v382 = vadd.f32 0.0, %v381
          %v383 = vpop.f32.mrf.mxu0
          %384 = vdwg.mxu0
          %v385 = vld [vmem:[%s328] sm:$0xff]
          %v386 = vadd.f32 %v385, %v382
          %387 = vst.msk [vmem:[#allocation2] sm:$0xff] %vm368, %v386
          %v388 = vld [vmem:[%s3] sm:$0x1]
          %v389 = vsel %vm368, %v386, 0.0
          %390 = vadd.xlane.f32.xlu0 %v389
          %v391 = vpop.xlane.xlu0 %390
          %v392 = vrcp.pop 32.0
          %v393 = vmul.f32 32.0, %v392
          %v394 = vsub.f32 1.0, %v393
          %v395 = vmul.f32 %v392, %v394
          %v396 = vadd.f32 %v392, %v395
          %vm397 = vweird.f32 %v392
          %v398 = vsel %vm397, %v392, %v396
          %v399 = vmul.f32 %v391, %v398
          %v400 = vsub.f32 %v386, %v399
          %v401 = vmul.f32 %v400, %v400
          %v402 = vsel %vm368, %v401, 0.0
          %403 = vadd.xlane.f32.xlu0 %v402
          %v404 = vpop.xlane.xlu0 %403
          %v405 = vmul.f32 %v404, %v398
          %v406 = vadd.f32 %v405, 1e-05
          %v407 = vrsqrt.pop %v406
          %v408 = vmul.f32 %v407, %v406
          %v409 = vmul.f32 %v408, %v407
          %v410 = vmul.f32 0.5, %v409
          %v411 = vsub.f32 1.5, %v410
          %v412 = vmul.f32 %v407, %v411
          %vm413 = vweird.f32 %v406
          %vm414 = vweird.f32 %v407
          %vm415 = vmor %vm413, %vm414
          %v416 = vsel %vm415, %v407, %v412
          %v417 = vmul.f32 %v400, %v416
          %v419 = vperm.slane %v388, 0
          %v421 = vmul.f32 %v417, %v419
          %v422 = vpack.c.bf16 %v421, %v421
          %vm423 = vcmask 257024
          %424 = vst.msk [vmem:[#allocation3] sm:$0xf] %vm423, %v422
          %425 = vst.msk [vmem:[#allocation4] sm:$0xff] %vm368, 0.0
        $region48: #{transformer_block.5} parent=43 // pred_fallthru
          _
        %v426 = vld [vmem:[#allocation3] sm:$0xf]
        %v427 = vld [vmem:[%s339] sm:$0xf]
        %v428 = vld [vmem:[%s339 + $0x4] sm:$0xf]
        %v429 = vld [vmem:[%s339 + $0x8] sm:$0xf]
        %v430 = vld [vmem:[%s339 + $0xc] sm:$0xf]
        %v435 = vunpack.c.l.b16 %v427
        %v436 = vunpack.c.l.b16 %v428
        %v437 = vunpack.c.l.b16 %v429
        %v438 = vunpack.c.l.b16 %v430
        %v439 = vpack.c.b16 %v436, %v435
        %v440 = vpack.c.b16 %v438, %v437
        %vm443 = vcmask 261120
        %v445 = vsel %vm443, %v426, 0
        %447 = vmatpush.bf16.msra.mxu0 0
        %448 = vmatpush.bf16.msra.mxu0 0
        %449 = vmatpush.bf16.msra.mxu0 0
        %450 = vmatpush.bf16.msra.mxu0 0
        %451 = vmatpush.bf16.msra.mxu0 0
        %452 = vmatpush.bf16.msra.mxu0 0
        %453 = vmatpush.bf16.msra.mxu0 %v440
        %454 = vmatpush.bf16.msra.mxu0 %v439
        %455 = vmatmul.bf16.gmra.mxu0 %v445
        %v456 = vpop.f32.mrf.mxu0
        %v457 = vadd.f32 0.0, %v456
        %v458 = vpop.f32.mrf.mxu0
        %459 = vdwg.mxu0
        %v460 = vmul.f32 %v457, 0.5
        %v461 = vmul.f32 %v457, 0.044715
        %v462 = vmul.f32 %v461, %v457
        %v463 = vmul.f32 %v462, %v457
        %v464 = vadd.f32 %v457, %v463
        %v465 = vmul.f32 %v464, 0.7978846
        %v466 = vtanh.pop %v465
        %v467 = vadd.f32 %v466, 1.0
        %v468 = vmul.f32 %v460, %v467
        %v469 = vpack.c.bf16 %v468, %v468
        %v470 = vld [vmem:[#allocation4] sm:$0xff]
        %v471 = vld [vmem:[%s344] sm:$0xf]
        %v472 = vld [vmem:[%s344 + $0x4] sm:$0xf]
        %v473 = vld [vmem:[%s344 + $0x8] sm:$0xf]
        %v474 = vld [vmem:[%s344 + $0xc] sm:$0xf]
        %v475 = vld [vmem:[%s344 + $0x10] sm:$0xf]
        %v476 = vld [vmem:[%s344 + $0x14] sm:$0xf]
        %v477 = vld [vmem:[%s344 + $0x18] sm:$0xf]
        %v478 = vld [vmem:[%s344 + $0x1c] sm:$0xf]
        %v479 = vld [vmem:[%s344 + $0x20] sm:$0xf]
        %v480 = vld [vmem:[%s344 + $0x24] sm:$0xf]
        %v481 = vld [vmem:[%s344 + $0x28] sm:$0xf]
        %v482 = vld [vmem:[%s344 + $0x2c] sm:$0xf]
        %v483 = vld [vmem:[%s344 + $0x30] sm:$0xf]
        %v484 = vld [vmem:[%s344 + $0x34] sm:$0xf]
        %v485 = vld [vmem:[%s344 + $0x38] sm:$0xf]
        %v486 = vld [vmem:[%s344 + $0x3c] sm:$0xf]
        %v503 = vunpack.c.l.b16 %v471
        %v504 = vunpack.c.l.b16 %v472
        %v505 = vunpack.c.l.b16 %v473
        %v506 = vunpack.c.l.b16 %v474
        %v507 = vunpack.c.l.b16 %v475
        %v508 = vunpack.c.l.b16 %v476
        %v509 = vunpack.c.l.b16 %v477
        %v510 = vunpack.c.l.b16 %v478
        %v511 = vunpack.c.l.b16 %v479
        %v512 = vunpack.c.l.b16 %v480
        %v513 = vunpack.c.l.b16 %v481
        %v514 = vunpack.c.l.b16 %v482
        %v515 = vunpack.c.l.b16 %v483
        %v516 = vunpack.c.l.b16 %v484
        %v517 = vunpack.c.l.b16 %v485
        %v518 = vunpack.c.l.b16 %v486
        %v519 = vpack.c.b16 %v504, %v503
        %v520 = vpack.c.b16 %v506, %v505
        %v521 = vpack.c.b16 %v508, %v507
        %v522 = vpack.c.b16 %v510, %v509
        %v523 = vpack.c.b16 %v512, %v511
        %v524 = vpack.c.b16 %v514, %v513
        %v525 = vpack.c.b16 %v516, %v515
        %v526 = vpack.c.b16 %v518, %v517
        %535 = vmatpush.bf16.msra.mxu0 %v526
        %536 = vmatpush.bf16.msra.mxu0 %v525
        %537 = vmatpush.bf16.msra.mxu0 %v524
        %538 = vmatpush.bf16.msra.mxu0 %v523
        %539 = vmatpush.bf16.msra.mxu0 %v522
        %540 = vmatpush.bf16.msra.mxu0 %v521
        %541 = vmatpush.bf16.msra.mxu0 %v520
        %542 = vmatpush.bf16.msra.mxu0 %v519
        %543 = vmatmul.bf16.gmra.mxu0 %v469
        %v544 = vpop.f32.mrf.mxu0
        %v545 = vadd.f32 0.0, %v544
        %v546 = vpop.f32.mrf.mxu0
        %547 = vdwg.mxu0
        %v548 = vadd.f32 %v470, %v545
        %549 = vst.msk [vmem:[#allocation4] sm:$0xff] %vm443, %v548
        // Predicated region
        $region49: #{transformer_block.5} parent=43 // pred_check
          %p550 = pneg %p347
        $region50: #{transformer_block.5} parent=43 // pred_check_branch
          %552 = sbr.rel (%p550) target = $region52
        $region51: #{transformer_block.5} parent=43 // pred_region
          %v553 = vld [vmem:[#allocation2] sm:$0xff]
          %v554 = vld [vmem:[#allocation4] sm:$0xff]
          %v555 = vadd.f32 %v553, %v554
          %556 = vst.msk [vmem:[%s321] sm:$0xff] %vm443, %v555
        $region52: #{transformer_block.5} parent=43 // pred_fallthru
          _
        %s557 = sand.u32 %s199, 1
        %s558 = scalar_lea.sflag [#allocation6], %s557
        %s559 = sand.u32 %s199, 1
        %s560 = smul.addr %s559, 8
        %s561 = scalar_lea.vmem [#allocation5], %s560
        // Predicated region
        $region53: #{transformer_block.5} parent=43 // pred_check
          %p562 = pneg %p209
        $region54: #{transformer_block.5} parent=43 // pred_check_branch
          %564 = sbr.rel (%p562) target = $region56
        $region55: #{transformer_block.5} parent=43 // pred_region
          %566 = vsyncadd %s558, 0
          %s567 = sadd.s32 %s26, %s25
          %s568 = smul.addr %s567, 8
          %s569 = scalar_lea.hbm %s6, %s568
          %s571 = sshll.u32 %s561, 4
          %s572 = int_to_ptr.vmem [resolvable:$true] %s571
          %s573 = sshll.u32 %s569, 4
          %s574 = int_to_ptr.hbm [resolvable:$true] %s573
          %576 = dma.vmem_to_hbm [thread:$0]  %s572, 128, %s574, %s558
        $region56: #{transformer_block.5} parent=43 // pred_fallthru
          _
      $region44: #{transformer_block.5} parent=5 // pred_fallthru
        _
      %p577 = scmp.le.s32.totalorder 2, %s15
      // Predicated region
      $region57: #{transformer_block.5} parent=5 // pred_check
        %p578 = pneg %p577
      $region58: #{transformer_block.5} parent=5 // pred_check_branch
        %580 = sbr.rel (%p578) target = $region60
      $region59: #{transformer_block.5} parent=5 // pred_region
        %s581 = ssub.s32 %s15, 2
        // Predicated region
        $region61: #{transformer_block.5} parent=59 // pred_check
          %p582 = pneg %p215
        $region62: #{transformer_block.5} parent=59 // pred_check_branch
          %584 = sbr.rel (%p582) target = $region64
        $region63: #{transformer_block.5} parent=59 // pred_region
          %s585 = sand.u32 %s200, 1
          %s586 = scalar_lea.sflag [#allocation6], %s585
          %s587 = sand.u32 %s200, 1
          %s588 = smul.addr %s587, 8
          %s589 = scalar_lea.vmem [#allocation5], %s588
          %591 = dma.done %s586, 128
        $region64: #{transformer_block.5} parent=59 // pred_fallthru
          _
      $region60: #{transformer_block.5} parent=5 // pred_fallthru
        _
    $region6: #{transformer_block.5} parent=1 // loop_footer
      %s19 = sadd.s32 1, %s15
    $region7: #{transformer_block.5} parent=1 // loop_footer_branch
      %14 = sbr.rel target = $region3
    $region8: #{transformer_block.5} parent=1 // loop_exit
      _
    %592 = vsyncpa [#allocation6], 1
    %s593 = scalar_lea.sflag [#allocation6], 1
    %594 = vsyncpa %s593, 1

</llo_original>
